<compile_context>
chip_gen: v7x
topology: tpu7x:2x2x1
jax: 0.10.0
libtpu: 0.0.40
codegen_flags: <defaults>
</compile_context>

<pallas_src>
import functools

import jax
import jax.numpy as jnp
import numpy as np
from jax.experimental import pallas as pl
from jax.experimental.pallas import tpu as pltpu


# ----------------------------------------------------------------------------- helpers
def _pick_row_tile(m, target=512):
    """Row tile for the token axis: multiple of 8, and >=2 grid blocks when possible so
    both v7x TensorCores get work (harmless on single-TC chips)."""
    tm = min(m, target)
    if m >= 16 and pl.cdiv(m, tm) < 2:
        tm = ((pl.cdiv(m, 2) + 7) // 8) * 8
    return max(tm, 1)


def _vmem_limit_bytes():
    """Explicit scoped-VMEM budget: 3/4 of the chip's physical VMEM (v5e's default scoped
    limit is only 16 MiB; v7x only has 64 MiB physical)."""
    try:
        cap = pltpu.get_tpu_info().vmem_capacity_bytes
    except Exception:  # pragma: no cover - conservative fallback
        cap = 64 * 1024 * 1024
    return int(cap * 3 // 4)


# ----------------------------------------------------------------------------- kernels
def _attn_kernel(xq_ref, xk_ref, xv_ref, wq_ref, wk_ref, wv_ref,
                 bq_ref, bk_ref, bv_ref, mask_ref, out_ref, attn_ref,
                 *, n_head, d_k, d_v, inv_temperature):
    """Fused per-batch block: QKV projection + scaled dot-product attention.

    xq: (Lq, E), xk/xv: (Lk, E)           raw activations
    wq/wk: (E, n_head*d_k), wv: (E, n_head*d_v), b*: (1, n_head*d)   VMEM-resident
    mask: (Lq, Lk) int8, nonzero == masked
    out : (Lq, n_head*d_v)                head-merged, lane-dense
    attn: (n_head, Lq, Lk)
    """
    # Lane-dense projections (single wide matmul each), f32 accumulation on the MXU.
    qp = jnp.dot(xq_ref[...], wq_ref[...], preferred_element_type=jnp.float32) + bq_ref[...]
    kp = jnp.dot(xk_ref[...], wk_ref[...], preferred_element_type=jnp.float32) + bk_ref[...]
    vp = jnp.dot(xv_ref[...], wv_ref[...], preferred_element_type=jnp.float32) + bv_ref[...]

    masked = mask_ref[...].astype(jnp.int32) != 0       # widen i8 -> i32, then compare

    for h in range(n_head):                              # static unroll over heads
        qh = qp[:, h * d_k:(h + 1) * d_k]                # static lane slices (VMEM values)
        kh = kp[:, h * d_k:(h + 1) * d_k]
        vh = vp[:, h * d_v:(h + 1) * d_v]

        # q @ k^T without an explicit transpose (MXU-native "NT" contraction).
        s = jax.lax.dot_general(qh, kh, (((1,), (1,)), ((), ())),
                                preferred_element_type=jnp.float32)
        s = s * inv_temperature

        # masked_fill(mask, -inf) followed by exp() == 0 at masked positions.
        e = jnp.where(masked, 0.0, jnp.exp(s))
        denom = jnp.sum(e, axis=-1, keepdims=True) + 1e-10
        r = pl.reciprocal(denom, approx=True)            # EUP slot
        r = r * (2.0 - denom * r)                        # one Newton step -> ~exact f32
        attn = e * r

        attn_ref[h] = attn
        out_ref[:, h * d_v:(h + 1) * d_v] = jnp.dot(
            attn, vh, preferred_element_type=jnp.float32)


def _out_kernel(x_ref, w_ref, b_ref, res_ref, gamma_ref, beta_ref, o_ref):
    # x: (TM, n_head*d_v) head-merged, w: (n_head*d_v, E) -- ONE full-depth matmul.
    y = jnp.dot(x_ref[...], w_ref[...], preferred_element_type=jnp.float32)
    y = y + b_ref[...] + res_ref[...]

    # LayerNorm over the last dim (eps = 1e-5, biased variance), math in f32.
    mean = jnp.mean(y, axis=-1, keepdims=True)
    var = jnp.mean((y - mean) ** 2, axis=-1, keepdims=True)
    norm = (y - mean) * jax.lax.rsqrt(var + 1e-5)
    o_ref[...] = norm * gamma_ref[...] + beta_ref[...]


# ----------------------------------------------------------------------------- wrappers
def _fused_attention(q, k, v, params, mask_i8, n_head, d_k, d_v, inv_temperature,
                     vmem_limit):
    sz_b, len_q, E = q.shape
    _, len_k, _ = k.shape

    kern = functools.partial(_attn_kernel, n_head=n_head, d_k=d_k, d_v=d_v,
                             inv_temperature=inv_temperature)
    const = dict(pipeline_mode=pl.Buffered(1))           # never-changing block index

    out, attn = pl.pallas_call(
        kern,
        out_shape=(
            jax.ShapeDtypeStruct((sz_b, len_q, n_head * d_v), jnp.float32),
            jax.ShapeDtypeStruct((n_head, sz_b, len_q, len_k), jnp.float32),
        ),
        grid=(sz_b,),
        in_specs=[
            pl.BlockSpec((None, len_q, E), lambda b: (b, 0, 0)),
            pl.BlockSpec((None, len_k, E), lambda b: (b, 0, 0)),
            pl.BlockSpec((None, len_k, E), lambda b: (b, 0, 0)),
            pl.BlockSpec((E, n_head * d_k), lambda b: (0, 0), **const),
            pl.BlockSpec((E, n_head * d_k), lambda b: (0, 0), **const),
            pl.BlockSpec((E, n_head * d_v), lambda b: (0, 0), **const),
            pl.BlockSpec((1, n_head * d_k), lambda b: (0, 0), **const),
            pl.BlockSpec((1, n_head * d_k), lambda b: (0, 0), **const),
            pl.BlockSpec((1, n_head * d_v), lambda b: (0, 0), **const),
            pl.BlockSpec((None, len_q, len_k), lambda b: (b, 0, 0)),   # int8 mask, 1x/batch
        ],
        out_specs=(
            pl.BlockSpec((None, len_q, n_head * d_v), lambda b: (b, 0, 0)),
            pl.BlockSpec((n_head, None, len_q, len_k), lambda b: (0, b, 0, 0)),
        ),
        compiler_params=pltpu.CompilerParams(
            dimension_semantics=("parallel",),
            vmem_limit_bytes=vmem_limit,
        ),
    )(
        q, k, v,
        params["w_qs_w"], params["w_ks_w"], params["w_vs_w"],
        params["w_qs_b"].reshape(1, n_head * d_k),
        params["w_ks_b"].reshape(1, n_head * d_k),
        params["w_vs_b"].reshape(1, n_head * d_v),
        mask_i8,
    )
    return out, attn


def _fc_residual_layernorm(x2d, w, b, res2d, gamma, beta, vmem_limit):
    # x2d: (M, n_head*d_v) head-merged; w: (n_head*d_v, E)
    M, K = x2d.shape
    E = w.shape[1]
    tm = _pick_row_tile(M)
    const = dict(pipeline_mode=pl.Buffered(1))

    return pl.pallas_call(
        _out_kernel,
        out_shape=jax.ShapeDtypeStruct((M, E), jnp.float32),
        grid=(pl.cdiv(M, tm),),
        in_specs=[
            pl.BlockSpec((tm, K), lambda i: (i, 0)),
            pl.BlockSpec((K, E), lambda i: (0, 0), **const),     # fc weight resident
            pl.BlockSpec((1, E), lambda i: (0, 0), **const),
            pl.BlockSpec((tm, E), lambda i: (i, 0)),              # residual
            pl.BlockSpec((1, E), lambda i: (0, 0), **const),
            pl.BlockSpec((1, E), lambda i: (0, 0), **const),
        ],
        out_specs=pl.BlockSpec((tm, E), lambda i: (i, 0)),
        compiler_params=pltpu.CompilerParams(
            dimension_semantics=("parallel",),
            vmem_limit_bytes=vmem_limit,
        ),
    )(x2d, w, b.reshape(1, E), res2d, gamma.reshape(1, E), beta.reshape(1, E))


def multi_head_attention(params, q, k, v, mask, *, num_head, k_dim, v_dim):
    """Pallas implementation of MultiHeadAttention.forward (inference mode).

    q, k, v : (sz_b, len, embed_dim) float32
    mask    : (sz_b, len_q, len_k) int/bool, nonzero == masked
    returns (output (sz_b, len_q, embed_dim), attn (num_head*sz_b, len_q, len_k))
    """
    sz_b, len_q, embed_dim = q.shape
    _, len_k, _ = k.shape
    d_k, d_v, n_head = k_dim, v_dim, num_head
    inv_temperature = float(1.0 / np.power(d_k, 0.5))
    vmem_limit = _vmem_limit_bytes()

    mask_i8 = (mask != 0).astype(jnp.int8)               # 4x less mask HBM traffic

    # -------- fused QKV projection + scaled dot-product attention (one call)
    out3, attn4 = _fused_attention(q, k, v, params, mask_i8, n_head, d_k, d_v,
                                   inv_temperature, vmem_limit)

    # -------- fc (single K=n_head*d_v matmul) + residual + LayerNorm
    out2d = _fc_residual_layernorm(
        out3.reshape(sz_b * len_q, n_head * d_v),         # free reshape (head-merged)
        params["fc_w"], params["fc_b"],
        q.reshape(sz_b * len_q, embed_dim),                # residual
        params["ln_gamma"], params["ln_beta"],
        vmem_limit,
    )

    return (out2d.reshape(sz_b, len_q, embed_dim),
            attn4.reshape(n_head * sz_b, len_q, len_k))    # free reshape (head-major)


# ----------------------------------------------------------------------------- reference
def _reference(params, q, k, v, mask, *, num_head, k_dim, v_dim):
    sz_b, len_q, E = q.shape
    _, len_k, _ = k.shape
    n_head, d_k, d_v = num_head, k_dim, v_dim
    temp = np.power(d_k, 0.5)

    residual = q
    qp = q.reshape(-1, E) @ params["w_qs_w"] + params["w_qs_b"]
    kp = k.reshape(-1, E) @ params["w_ks_w"] + params["w_ks_b"]
    vp = v.reshape(-1, E) @ params["w_vs_w"] + params["w_vs_b"]
    qp = qp.reshape(sz_b, len_q, n_head, d_k).transpose(2, 0, 1, 3).reshape(-1, len_q, d_k)
    kp = kp.reshape(sz_b, len_k, n_head, d_k).transpose(2, 0, 1, 3).reshape(-1, len_k, d_k)
    vp = vp.reshape(sz_b, len_k, n_head, d_v).transpose(2, 0, 1, 3).reshape(-1, len_k, d_v)
    m = jnp.tile(mask.astype(bool), (n_head, 1, 1))

    scores = jnp.einsum("bqd,bkd->bqk", qp, kp) / temp
    e = jnp.where(m, 0.0, jnp.exp(scores))
    attn = e / (jnp.sum(e, axis=-1, keepdims=True) + 1e-10)
    out = jnp.einsum("bqk,bkd->bqd", attn, vp)
    out = (
        out.reshape(n_head, sz_b, len_q, d_v)
        .transpose(1, 2, 0, 3)
        .reshape(sz_b, len_q, n_head * d_v)
    )
    y = out.reshape(-1, n_head * d_v) @ params["fc_w"] + params["fc_b"]
    y = y + residual.reshape(-1, E)
    mean = jnp.mean(y, axis=-1, keepdims=True)
    var = jnp.mean((y - mean) ** 2, axis=-1, keepdims=True)
    y = (y - mean) * jax.lax.rsqrt(var + 1e-5) * params["ln_gamma"] + params["ln_beta"]
    return y.reshape(sz_b, len_q, E), attn


# ----------------------------------------------------------------------------- main
if __name__ == "__main__":
    # module config
    num_head, embed_dim, k_dim, v_dim = 2, 32, 16, 16
    sz_b, seq = 2, 8

    key = jax.random.PRNGKey(0)
    keys = jax.random.split(key, 12)

    std_qk = np.sqrt(2.0 / (embed_dim + k_dim))
    std_v = np.sqrt(2.0 / (embed_dim + v_dim))
    std_fc = np.sqrt(2.0 / (num_head * v_dim + embed_dim))  # xavier_normal

    params = {
        "w_qs_w": std_qk * jax.random.normal(keys[0], (embed_dim, num_head * k_dim), jnp.float32),
        "w_qs_b": 0.01 * jax.random.normal(keys[1], (num_head * k_dim,), jnp.float32),
        "w_ks_w": std_qk * jax.random.normal(keys[2], (embed_dim, num_head * k_dim), jnp.float32),
        "w_ks_b": 0.01 * jax.random.normal(keys[3], (num_head * k_dim,), jnp.float32),
        "w_vs_w": std_v * jax.random.normal(keys[4], (embed_dim, num_head * v_dim), jnp.float32),
        "w_vs_b": 0.01 * jax.random.normal(keys[5], (num_head * v_dim,), jnp.float32),
        "fc_w": std_fc * jax.random.normal(keys[6], (num_head * v_dim, embed_dim), jnp.float32),
        "fc_b": 0.01 * jax.random.normal(keys[7], (embed_dim,), jnp.float32),
        "ln_gamma": jnp.ones((embed_dim,), jnp.float32),
        "ln_beta": jnp.zeros((embed_dim,), jnp.float32),
    }

    q = jax.random.normal(keys[8], (sz_b, seq, embed_dim), jnp.float32)
    k = jax.random.normal(keys[9], (sz_b, seq, embed_dim), jnp.float32)
    v = jax.random.normal(keys[10], (sz_b, seq, embed_dim), jnp.float32)
    mask = (jax.random.uniform(keys[11], (sz_b, seq, seq)) < 0.3).astype(jnp.int32)

    out, attn = multi_head_attention(
        params, q, k, v, mask, num_head=num_head, k_dim=k_dim, v_dim=v_dim
    )
    out = jax.block_until_ready(out)
    attn = jax.block_until_ready(attn)

    # sanity check vs pure-JAX reference
    ref_out, ref_attn = _reference(
        params, q, k, v, mask, num_head=num_head, k_dim=k_dim, v_dim=v_dim
    )
    assert out.shape == (sz_b, seq, embed_dim)
    assert attn.shape == (num_head * sz_b, seq, seq)
    np.testing.assert_allclose(np.asarray(out), np.asarray(ref_out), rtol=2e-2, atol=2e-2)
    np.testing.assert_allclose(np.asarray(attn), np.asarray(ref_attn), rtol=2e-2, atol=2e-2)

    print("KERNEL_OK")
</pallas_src>

<mosaic_0001>
module attributes {stable_mosaic.version = 11 : i64} {
  func.func @_attn_kernel(%arg0: i32, %arg1: memref<1x8x32xf32, #tpu.memory_space<vmem>>, %arg2: memref<1x8x32xf32, #tpu.memory_space<vmem>>, %arg3: memref<1x8x32xf32, #tpu.memory_space<vmem>>, %arg4: memref<32x32xf32, #tpu.memory_space<vmem>>, %arg5: memref<32x32xf32, #tpu.memory_space<vmem>>, %arg6: memref<32x32xf32, #tpu.memory_space<vmem>>, %arg7: memref<1x32xf32, #tpu.memory_space<vmem>>, %arg8: memref<1x32xf32, #tpu.memory_space<vmem>>, %arg9: memref<1x32xf32, #tpu.memory_space<vmem>>, %arg10: memref<1x8x8xi8, #tpu.memory_space<vmem>>, %arg11: memref<1x8x32xf32, #tpu.memory_space<vmem>>, %arg12: memref<2x1x8x8xf32, #tpu.memory_space<vmem>>) attributes {dimension_semantics = [#tpu.dimension_semantics<parallel>], iteration_bounds = array<i64: 2>, scalar_prefetch = 0 : i64, scratch_operands = 0 : i64, tpu.core_type = #tpu.core_type<tc>, window_params = [{transform_indices = @transform_0, window_bounds = array<i64: 1, 8, 32>}, {transform_indices = @transform_1, window_bounds = array<i64: 1, 8, 32>}, {transform_indices = @transform_2, window_bounds = array<i64: 1, 8, 32>}, {pipeline_mode = #tpu.pipeline_mode<synchronous>, transform_indices = @transform_3, window_bounds = array<i64: 32, 32>}, {pipeline_mode = #tpu.pipeline_mode<synchronous>, transform_indices = @transform_4, window_bounds = array<i64: 32, 32>}, {pipeline_mode = #tpu.pipeline_mode<synchronous>, transform_indices = @transform_5, window_bounds = array<i64: 32, 32>}, {pipeline_mode = #tpu.pipeline_mode<synchronous>, transform_indices = @transform_6, window_bounds = array<i64: 1, 32>}, {pipeline_mode = #tpu.pipeline_mode<synchronous>, transform_indices = @transform_7, window_bounds = array<i64: 1, 32>}, {pipeline_mode = #tpu.pipeline_mode<synchronous>, transform_indices = @transform_8, window_bounds = array<i64: 1, 32>}, {transform_indices = @transform_9, window_bounds = array<i64: 1, 8, 8>}, {transform_indices = @transform_10, window_bounds = array<i64: 1, 8, 32>}, {transform_indices = @transform_11, window_bounds = array<i64: 2, 1, 8, 8>}]} {
    %c0 = arith.constant 0 : index
    %c0_0 = arith.constant 0 : index
    %c0_1 = arith.constant 0 : index
    %0 = vector.load %arg1[%c0, %c0_0, %c0_1] : memref<1x8x32xf32, #tpu.memory_space<vmem>>, vector<1x8x32xf32>
    %1 = vector.shape_cast %0 : vector<1x8x32xf32> to vector<8x32xf32>
    %c0_2 = arith.constant 0 : index
    %c0_3 = arith.constant 0 : index
    %2 = vector.load %arg4[%c0_2, %c0_3] : memref<32x32xf32, #tpu.memory_space<vmem>>, vector<32x32xf32>
    %cst = arith.constant dense<0.000000e+00> : vector<8x32xf32>
    %3 = tpu.matmul %1, %2, %cst {dimension_numbers = #tpu.dot_dimension_numbers<[1], [0], [0], [1], [0, 0, 1, 1], [], []>} : vector<8x32xf32>, vector<32x32xf32>, vector<8x32xf32> -> vector<8x32xf32>
    %c0_4 = arith.constant 0 : index
    %c0_5 = arith.constant 0 : index
    %4 = vector.load %arg7[%c0_4, %c0_5] : memref<1x32xf32, #tpu.memory_space<vmem>>, vector<1x32xf32>
    %5 = vector.broadcast %4 : vector<1x32xf32> to vector<8x32xf32>
    %6 = arith.addf %3, %5 : vector<8x32xf32>
    %c0_6 = arith.constant 0 : index
    %c0_7 = arith.constant 0 : index
    %c0_8 = arith.constant 0 : index
    %7 = vector.load %arg2[%c0_6, %c0_7, %c0_8] : memref<1x8x32xf32, #tpu.memory_space<vmem>>, vector<1x8x32xf32>
    %8 = vector.shape_cast %7 : vector<1x8x32xf32> to vector<8x32xf32>
    %c0_9 = arith.constant 0 : index
    %c0_10 = arith.constant 0 : index
    %9 = vector.load %arg5[%c0_9, %c0_10] : memref<32x32xf32, #tpu.memory_space<vmem>>, vector<32x32xf32>
    %cst_11 = arith.constant dense<0.000000e+00> : vector<8x32xf32>
    %10 = tpu.matmul %8, %9, %cst_11 {dimension_numbers = #tpu.dot_dimension_numbers<[1], [0], [0], [1], [0, 0, 1, 1], [], []>} : vector<8x32xf32>, vector<32x32xf32>, vector<8x32xf32> -> vector<8x32xf32>
    %c0_12 = arith.constant 0 : index
    %c0_13 = arith.constant 0 : index
    %11 = vector.load %arg8[%c0_12, %c0_13] : memref<1x32xf32, #tpu.memory_space<vmem>>, vector<1x32xf32>
    %12 = vector.broadcast %11 : vector<1x32xf32> to vector<8x32xf32>
    %13 = arith.addf %10, %12 : vector<8x32xf32>
    %c0_14 = arith.constant 0 : index
    %c0_15 = arith.constant 0 : index
    %c0_16 = arith.constant 0 : index
    %14 = vector.load %arg3[%c0_14, %c0_15, %c0_16] : memref<1x8x32xf32, #tpu.memory_space<vmem>>, vector<1x8x32xf32>
    %15 = vector.shape_cast %14 : vector<1x8x32xf32> to vector<8x32xf32>
    %c0_17 = arith.constant 0 : index
    %c0_18 = arith.constant 0 : index
    %16 = vector.load %arg6[%c0_17, %c0_18] : memref<32x32xf32, #tpu.memory_space<vmem>>, vector<32x32xf32>
    %cst_19 = arith.constant dense<0.000000e+00> : vector<8x32xf32>
    %17 = tpu.matmul %15, %16, %cst_19 {dimension_numbers = #tpu.dot_dimension_numbers<[1], [0], [0], [1], [0, 0, 1, 1], [], []>} : vector<8x32xf32>, vector<32x32xf32>, vector<8x32xf32> -> vector<8x32xf32>
    %c0_20 = arith.constant 0 : index
    %c0_21 = arith.constant 0 : index
    %18 = vector.load %arg9[%c0_20, %c0_21] : memref<1x32xf32, #tpu.memory_space<vmem>>, vector<1x32xf32>
    %19 = vector.broadcast %18 : vector<1x32xf32> to vector<8x32xf32>
    %20 = arith.addf %17, %19 : vector<8x32xf32>
    %c0_22 = arith.constant 0 : index
    %c0_23 = arith.constant 0 : index
    %c0_24 = arith.constant 0 : index
    %21 = vector.load %arg10[%c0_22, %c0_23, %c0_24] : memref<1x8x8xi8, #tpu.memory_space<vmem>>, vector<1x8x8xi8>
    %22 = vector.shape_cast %21 : vector<1x8x8xi8> to vector<8x8xi8>
    %23 = arith.extsi %22 : vector<8x8xi8> to vector<8x8xi32>
    %c0_i32 = arith.constant 0 : i32
    %24 = vector.broadcast %c0_i32 : i32 to vector<8x8xi32>
    %25 = arith.cmpi ne, %23, %24 : vector<8x8xi32>
    %26 = vector.extract_strided_slice %6 {offsets = [0, 0], sizes = [8, 16], strides = [1, 1]} : vector<8x32xf32> to vector<8x16xf32>
    %27 = vector.extract_strided_slice %13 {offsets = [0, 0], sizes = [8, 16], strides = [1, 1]} : vector<8x32xf32> to vector<8x16xf32>
    %28 = vector.extract_strided_slice %20 {offsets = [0, 0], sizes = [8, 16], strides = [1, 1]} : vector<8x32xf32> to vector<8x16xf32>
    %cst_25 = arith.constant dense<0.000000e+00> : vector<8x8xf32>
    %29 = tpu.matmul %26, %27, %cst_25 {dimension_numbers = #tpu.dot_dimension_numbers<[1], [1], [0], [0], [0, 0, 1, 0], [], []>} : vector<8x16xf32>, vector<8x16xf32>, vector<8x8xf32> -> vector<8x8xf32>
    %cst_26 = arith.constant 2.500000e-01 : f32
    %30 = vector.broadcast %cst_26 : f32 to vector<8x8xf32>
    %31 = arith.mulf %29, %30 : vector<8x8xf32>
    %32 = math.exp %31 : vector<8x8xf32>
    %cst_27 = arith.constant 0.000000e+00 : f32
    %33 = vector.broadcast %cst_27 : f32 to vector<8x8xf32>
    %34 = arith.select %25, %33, %32 : vector<8x8xi1>, vector<8x8xf32>
    %cst_28 = arith.constant dense<0.000000e+00> : vector<8xf32>
    %35 = vector.multi_reduction <add>, %34, %cst_28 [1] : vector<8x8xf32> to vector<8xf32>
    %36 = vector.shape_cast %35 : vector<8xf32> to vector<8x1xf32>
    %cst_29 = arith.constant 1.000000e-10 : f32
    %37 = vector.broadcast %cst_29 : f32 to vector<8x1xf32>
    %38 = arith.addf %36, %37 : vector<8x1xf32>
    %39 = tpu.reciprocal %38 {approx = true} : vector<8x1xf32> -> vector<8x1xf32>
    %40 = arith.mulf %38, %39 : vector<8x1xf32>
    %cst_30 = arith.constant 2.000000e+00 : f32
    %41 = vector.broadcast %cst_30 : f32 to vector<8x1xf32>
    %42 = arith.subf %41, %40 : vector<8x1xf32>
    %43 = arith.mulf %39, %42 : vector<8x1xf32>
    %44 = vector.broadcast %43 : vector<8x1xf32> to vector<8x8xf32>
    %45 = arith.mulf %34, %44 : vector<8x8xf32>
    %c0_31 = arith.constant 0 : index
    %c0_32 = arith.constant 0 : index
    %c0_33 = arith.constant 0 : index
    %c0_34 = arith.constant 0 : index
    %46 = vector.load %arg12[%c0_31, %c0_32, %c0_33, %c0_34] : memref<2x1x8x8xf32, #tpu.memory_space<vmem>>, vector<1x1x8x8xf32>
    %47 = vector.shape_cast %46 : vector<1x1x8x8xf32> to vector<8x8xf32>
    %48 = vector.shape_cast %45 : vector<8x8xf32> to vector<1x1x8x8xf32>
    tpu.vector_store %arg12[%c0_31, %c0_32, %c0_33, %c0_34], %48 {strides = array<i32>} : memref<2x1x8x8xf32, #tpu.memory_space<vmem>>, vector<1x1x8x8xf32>,
    %cst_35 = arith.constant dense<0.000000e+00> : vector<8x16xf32>
    %49 = tpu.matmul %45, %28, %cst_35 {dimension_numbers = #tpu.dot_dimension_numbers<[1], [0], [0], [1], [0, 0, 1, 1], [], []>} : vector<8x8xf32>, vector<8x16xf32>, vector<8x16xf32> -> vector<8x16xf32>
    %c0_36 = arith.constant 0 : index
    %c0_37 = arith.constant 0 : index
    %c0_38 = arith.constant 0 : index
    %50 = vector.load %arg11[%c0_36, %c0_37, %c0_38] : memref<1x8x32xf32, #tpu.memory_space<vmem>>, vector<1x8x16xf32>
    %51 = vector.shape_cast %50 : vector<1x8x16xf32> to vector<8x16xf32>
    %52 = vector.shape_cast %49 : vector<8x16xf32> to vector<1x8x16xf32>
    tpu.vector_store %arg11[%c0_36, %c0_37, %c0_38], %52 {strides = array<i32>} : memref<1x8x32xf32, #tpu.memory_space<vmem>>, vector<1x8x16xf32>,
    %53 = vector.extract_strided_slice %6 {offsets = [0, 16], sizes = [8, 16], strides = [1, 1]} : vector<8x32xf32> to vector<8x16xf32>
    %54 = vector.extract_strided_slice %13 {offsets = [0, 16], sizes = [8, 16], strides = [1, 1]} : vector<8x32xf32> to vector<8x16xf32>
    %55 = vector.extract_strided_slice %20 {offsets = [0, 16], sizes = [8, 16], strides = [1, 1]} : vector<8x32xf32> to vector<8x16xf32>
    %cst_39 = arith.constant dense<0.000000e+00> : vector<8x8xf32>
    %56 = tpu.matmul %53, %54, %cst_39 {dimension_numbers = #tpu.dot_dimension_numbers<[1], [1], [0], [0], [0, 0, 1, 0], [], []>} : vector<8x16xf32>, vector<8x16xf32>, vector<8x8xf32> -> vector<8x8xf32>
    %cst_40 = arith.constant 2.500000e-01 : f32
    %57 = vector.broadcast %cst_40 : f32 to vector<8x8xf32>
    %58 = arith.mulf %56, %57 : vector<8x8xf32>
    %59 = math.exp %58 : vector<8x8xf32>
    %cst_41 = arith.constant 0.000000e+00 : f32
    %60 = vector.broadcast %cst_41 : f32 to vector<8x8xf32>
    %61 = arith.select %25, %60, %59 : vector<8x8xi1>, vector<8x8xf32>
    %cst_42 = arith.constant dense<0.000000e+00> : vector<8xf32>
    %62 = vector.multi_reduction <add>, %61, %cst_42 [1] : vector<8x8xf32> to vector<8xf32>
    %63 = vector.shape_cast %62 : vector<8xf32> to vector<8x1xf32>
    %cst_43 = arith.constant 1.000000e-10 : f32
    %64 = vector.broadcast %cst_43 : f32 to vector<8x1xf32>
    %65 = arith.addf %63, %64 : vector<8x1xf32>
    %66 = tpu.reciprocal %65 {approx = true} : vector<8x1xf32> -> vector<8x1xf32>
    %67 = arith.mulf %65, %66 : vector<8x1xf32>
    %cst_44 = arith.constant 2.000000e+00 : f32
    %68 = vector.broadcast %cst_44 : f32 to vector<8x1xf32>
    %69 = arith.subf %68, %67 : vector<8x1xf32>
    %70 = arith.mulf %66, %69 : vector<8x1xf32>
    %71 = vector.broadcast %70 : vector<8x1xf32> to vector<8x8xf32>
    %72 = arith.mulf %61, %71 : vector<8x8xf32>
    %c1 = arith.constant 1 : index
    %c0_45 = arith.constant 0 : index
    %c0_46 = arith.constant 0 : index
    %c0_47 = arith.constant 0 : index
    %73 = vector.load %arg12[%c1, %c0_45, %c0_46, %c0_47] : memref<2x1x8x8xf32, #tpu.memory_space<vmem>>, vector<1x1x8x8xf32>
    %74 = vector.shape_cast %73 : vector<1x1x8x8xf32> to vector<8x8xf32>
    %75 = vector.shape_cast %72 : vector<8x8xf32> to vector<1x1x8x8xf32>
    tpu.vector_store %arg12[%c1, %c0_45, %c0_46, %c0_47], %75 {strides = array<i32>} : memref<2x1x8x8xf32, #tpu.memory_space<vmem>>, vector<1x1x8x8xf32>,
    %cst_48 = arith.constant dense<0.000000e+00> : vector<8x16xf32>
    %76 = tpu.matmul %72, %55, %cst_48 {dimension_numbers = #tpu.dot_dimension_numbers<[1], [0], [0], [1], [0, 0, 1, 1], [], []>} : vector<8x8xf32>, vector<8x16xf32>, vector<8x16xf32> -> vector<8x16xf32>
    %c0_49 = arith.constant 0 : index
    %c0_50 = arith.constant 0 : index
    %c16 = arith.constant 16 : index
    %77 = vector.load %arg11[%c0_49, %c0_50, %c16] : memref<1x8x32xf32, #tpu.memory_space<vmem>>, vector<1x8x16xf32>
    %78 = vector.shape_cast %77 : vector<1x8x16xf32> to vector<8x16xf32>
    %79 = vector.shape_cast %76 : vector<8x16xf32> to vector<1x8x16xf32>
    tpu.vector_store %arg11[%c0_49, %c0_50, %c16], %79 {strides = array<i32>} : memref<1x8x32xf32, #tpu.memory_space<vmem>>, vector<1x8x16xf32>,
    return
  }
  func.func @transform_0(%arg0: i32) -> (i32, i32, i32) {
    %c0_i32 = arith.constant 0 : i32
    %c0_i32_0 = arith.constant 0 : i32
    %c0_i32_1 = arith.constant 0 : i32
    return %arg0, %c0_i32, %c0_i32_0 : i32, i32, i32
  }
  func.func @transform_1(%arg0: i32) -> (i32, i32, i32) {
    %c0_i32 = arith.constant 0 : i32
    %c0_i32_0 = arith.constant 0 : i32
    %c0_i32_1 = arith.constant 0 : i32
    return %arg0, %c0_i32, %c0_i32_0 : i32, i32, i32
  }
  func.func @transform_2(%arg0: i32) -> (i32, i32, i32) {
    %c0_i32 = arith.constant 0 : i32
    %c0_i32_0 = arith.constant 0 : i32
    %c0_i32_1 = arith.constant 0 : i32
    return %arg0, %c0_i32, %c0_i32_0 : i32, i32, i32
  }
  func.func @transform_3(%arg0: i32) -> (i32, i32) {
    %c0_i32 = arith.constant 0 : i32
    %c0_i32_0 = arith.constant 0 : i32
    %c0_i32_1 = arith.constant 0 : i32
    return %c0_i32, %c0_i32_0 : i32, i32
  }
  func.func @transform_4(%arg0: i32) -> (i32, i32) {
    %c0_i32 = arith.constant 0 : i32
    %c0_i32_0 = arith.constant 0 : i32
    %c0_i32_1 = arith.constant 0 : i32
    return %c0_i32, %c0_i32_0 : i32, i32
  }
  func.func @transform_5(%arg0: i32) -> (i32, i32) {
    %c0_i32 = arith.constant 0 : i32
    %c0_i32_0 = arith.constant 0 : i32
    %c0_i32_1 = arith.constant 0 : i32
    return %c0_i32, %c0_i32_0 : i32, i32
  }
  func.func @transform_6(%arg0: i32) -> (i32, i32) {
    %c0_i32 = arith.constant 0 : i32
    %c0_i32_0 = arith.constant 0 : i32
    %c0_i32_1 = arith.constant 0 : i32
    return %c0_i32, %c0_i32_0 : i32, i32
  }
  func.func @transform_7(%arg0: i32) -> (i32, i32) {
    %c0_i32 = arith.constant 0 : i32
    %c0_i32_0 = arith.constant 0 : i32
    %c0_i32_1 = arith.constant 0 : i32
    return %c0_i32, %c0_i32_0 : i32, i32
  }
  func.func @transform_8(%arg0: i32) -> (i32, i32) {
    %c0_i32 = arith.constant 0 : i32
    %c0_i32_0 = arith.constant 0 : i32
    %c0_i32_1 = arith.constant 0 : i32
    return %c0_i32, %c0_i32_0 : i32, i32
  }
  func.func @transform_9(%arg0: i32) -> (i32, i32, i32) {
    %c0_i32 = arith.constant 0 : i32
    %c0_i32_0 = arith.constant 0 : i32
    %c0_i32_1 = arith.constant 0 : i32
    return %arg0, %c0_i32, %c0_i32_0 : i32, i32, i32
  }
  func.func @transform_10(%arg0: i32) -> (i32, i32, i32) {
    %c0_i32 = arith.constant 0 : i32
    %c0_i32_0 = arith.constant 0 : i32
    %c0_i32_1 = arith.constant 0 : i32
    return %arg0, %c0_i32, %c0_i32_0 : i32, i32, i32
  }
  func.func @transform_11(%arg0: i32) -> (i32, i32, i32, i32) {
    %c0_i32 = arith.constant 0 : i32
    %c0_i32_0 = arith.constant 0 : i32
    %c0_i32_1 = arith.constant 0 : i32
    %c0_i32_2 = arith.constant 0 : i32
    return %c0_i32, %arg0, %c0_i32_0, %c0_i32_1 : i32, i32, i32, i32
  }
}

</mosaic_0001>

<llo_original>
// kernel: tpu_custom_call.1
$region0: #{tpu_custom_call.1}
  #allocation0 [shape = 'u32[]', space=smem, size = 0x4, offset = 0x4, fixed_abs, tag = 'smem constant byte address 0x4 - core index']
  #allocation1 [shape = 'u32[144,128]{1,0:T(1,128)}', space=vmem, size = 0x12000, scoped, tag = 'internal scratch']
  %s0 = inlined_call_operand.hbm [shape: f32[2,8,32], index: 0, kind: input, shape index: {}]
  %s1 = inlined_call_operand.hbm [shape: f32[2,8,32], index: 1, kind: input, shape index: {}]
  %s2 = inlined_call_operand.hbm [shape: f32[2,8,32], index: 2, kind: input, shape index: {}]
  %s3 = inlined_call_operand.hbm [shape: f32[32,32], index: 3, kind: input, shape index: {}]
  %s4 = inlined_call_operand.hbm [shape: f32[32,32], index: 4, kind: input, shape index: {}]
  %s5 = inlined_call_operand.hbm [shape: f32[32,32], index: 5, kind: input, shape index: {}]
  %s6 = inlined_call_operand.vmem [shape: f32[1,32], index: 6, kind: input, shape index: {}]
  %s7 = inlined_call_operand.vmem [shape: f32[1,32], index: 7, kind: input, shape index: {}]
  %s8 = inlined_call_operand.vmem [shape: f32[1,32], index: 8, kind: input, shape index: {}]
  %s9 = inlined_call_operand.vmem [shape: s8[2,8,8], index: 9, kind: input, shape index: {}]
  %s10 = inlined_call_operand.hbm [shape: f32[2,8,32], index: 10, kind: output, shape index: {0}]
  %s11 = inlined_call_operand.hbm [shape: f32[2,2,8,8], index: 11, kind: output, shape index: {1}]
  %12 = xla_tuple %s10, %s11
  %s13 = sld [smem:[#allocation0]]
  $region105: #{tpu_custom_call.1} parent=0
    _
  %s15 = ssub.s32 1, %s13
  %s16 = scalar_select 0, %s15, %s13
  $region1: #{tpu_custom_call.1} parent=0
    #allocation2 [shape = 'u8[8192]{0}', space=vmem, size = 0x2000, scoped, tag = 'input window, operand 0']
    #allocation3 [shape = 's32[2]{0}', space=sflag, size = 0x8, scoped, tag = 'scoped memory for tpu_custom_call.1']
    #allocation4 [shape = 's32[2]{0}', space=sflag, size = 0x8, scoped, tag = 'scoped memory for tpu_custom_call.1']
    #allocation5 [shape = 'u8[8192]{0}', space=vmem, size = 0x2000, scoped, tag = 'input window, operand 1']
    #allocation6 [shape = 's32[2]{0}', space=sflag, size = 0x8, scoped, tag = 'scoped memory for tpu_custom_call.1']
    #allocation7 [shape = 'u8[8192]{0}', space=vmem, size = 0x2000, scoped, tag = 'input window, operand 2']
    #allocation8 [shape = 'u8[16384]{0}', space=vmem, size = 0x4000, scoped, tag = 'input window, operand 3, single buffered']
    #allocation9 [shape = 's32[1]{0}', space=sflag, size = 0x4, scoped, tag = 'scoped memory for tpu_custom_call.1']
    #allocation10 [shape = 'u8[16384]{0}', space=vmem, size = 0x4000, scoped, tag = 'input window, operand 4, single buffered']
    #allocation11 [shape = 'u8[16384]{0}', space=vmem, size = 0x4000, scoped, tag = 'input window, operand 5, single buffered']
    #allocation12 [shape = 's32[1]{0}', space=sflag, size = 0x4, scoped, tag = 'scoped memory for tpu_custom_call.1']
    #allocation13 [shape = 'u8[8192]{0}', space=vmem, size = 0x2000, scoped, tag = 'output window, operand 0']
    #allocation14 [shape = 'u8[16384]{0}', space=vmem, size = 0x4000, scoped, tag = 'output window, operand 1']
    #allocation15 [shape = 's32[2]{0}', space=sflag, size = 0x8, scoped, tag = 'scoped memory for tpu_custom_call.1']
    %17 = vsyncpa [#allocation3], 0
    %s18 = scalar_lea.sflag [#allocation3], 1
    %19 = vsyncpa %s18, 0
    %20 = vsyncpa [#allocation6], 0
    %s21 = scalar_lea.sflag [#allocation6], 1
    %22 = vsyncpa %s21, 0
    %23 = vsyncpa [#allocation9], 0
    %24 = vsyncpa [#allocation12], 0
    %25 = vsyncpa [#allocation4], 0
    %s26 = scalar_lea.sflag [#allocation4], 1
    %27 = vsyncpa %s26, 0
    %28 = vsyncpa [#allocation15], 0
    %s29 = scalar_lea.sflag [#allocation15], 1
    %30 = vsyncpa %s29, 0
    loop: start=0, step=1, limit=4
    $region2: #{tpu_custom_call.1} parent=1 // loop_pre_header
      _
    $region3: #{tpu_custom_call.1} parent=1 // loop_header
      %s32 = sphi 0, %s36
      %p33 = scmp.ge.s32.totalorder %s32, 4
      %s42 = sphi 0, %s44
      %s45 = sphi 0, %s42
      %s46 = sphi 0, %s45
      %s62 = sphi 0, %s46
      %s68 = sphi 0, %s70
      %s71 = sphi 0, %s68
      %s72 = sphi 0, %s71
      %s88 = sphi 0, %s72
      %s94 = sphi 0, %s96
      %s97 = sphi 0, %s94
      %s98 = sphi 0, %s97
      %s114 = sphi 0, %s98
      %s118 = sphi 0, %s118
      %s120 = sphi 0, %s118
      %s121 = sphi 0, %s120
      %s135 = sphi 0, %s121
      %s139 = sphi 0, %s139
      %s141 = sphi 0, %s139
      %s142 = sphi 0, %s141
      %s156 = sphi 0, %s142
      %s160 = sphi 0, %s160
      %s162 = sphi 0, %s160
      %s163 = sphi 0, %s162
      %s177 = sphi 0, %s163
      %s181 = sphi 0, %s181
      %s183 = sphi 0, %s181
      %s184 = sphi 0, %s183
      %s198 = sphi 0, %s184
      %s202 = sphi 0, %s202
      %s204 = sphi 0, %s202
      %s205 = sphi 0, %s204
      %s219 = sphi 0, %s205
      %s223 = sphi 0, %s223
      %s225 = sphi 0, %s223
      %s226 = sphi 0, %s225
      %s240 = sphi 0, %s226
      %s246 = sphi 0, %s248
      %s249 = sphi 0, %s246
      %s250 = sphi 0, %s249
      %s266 = sphi 0, %s250
      %s272 = sphi 0, %s274
      %s275 = sphi 0, %s272
      %s276 = sphi 0, %s275
      %s292 = sphi 0, %s276
      %s298 = sphi 0, %s300
      %s301 = sphi 0, %s298
      %s302 = sphi 0, %s301
      %s318 = sphi 0, %s302
    $region4: #{tpu_custom_call.1} parent=1 // loop_header_branch
      %35 = sbr.rel (%p33) target = $region8
    $region5: #{tpu_custom_call.1} parent=1 // loop_body
      %s37 = ssub.s32 %s32, 1
      %s38 = ssub.s32 %s32, 2
      %s39 = sadd.s32 %s32, 1
      %s40 = ssub.s32 %s32, %s39
      %p41 = scmp.eq.s32.totalorder %s40, 0
      %s43 = sadd.s32 %s42, 1
      %s44 = scalar_select %p41, %s42, %s43
      %p47 = pneg %p41
      %p48 = scmp.eq.s32.totalorder %s32, 1
      %p49 = por %p47, %p48
      %p50 = scmp.ne.s32.totalorder %s42, %s45
      %p51 = scmp.eq.s32.totalorder %s32, 0
      %p52 = por %p50, %p51
      %p53 = scmp.ne.s32.totalorder %s42, %s45
      %p54 = scmp.eq.s32.totalorder %s37, 1
      %p55 = por %p53, %p54
      %p56 = scmp.ne.s32.totalorder %s45, %s46
      %p57 = scmp.eq.s32.totalorder %s37, 0
      %p58 = por %p56, %p57
      %p59 = scmp.ne.s32.totalorder %s45, %s46
      %p60 = scmp.eq.s32.totalorder %s38, 1
      %p61 = por %p59, %p60
      %p63 = scmp.ne.s32.totalorder %s46, %s62
      %p64 = scmp.eq.s32.totalorder %s38, 0
      %p65 = por %p63, %p64
      %s66 = ssub.s32 %s32, %s39
      %p67 = scmp.eq.s32.totalorder %s66, 0
      %s69 = sadd.s32 %s68, 1
      %s70 = scalar_select %p67, %s68, %s69
      %p73 = pneg %p67
      %p74 = scmp.eq.s32.totalorder %s32, 1
      %p75 = por %p73, %p74
      %p76 = scmp.ne.s32.totalorder %s68, %s71
      %p77 = scmp.eq.s32.totalorder %s32, 0
      %p78 = por %p76, %p77
      %p79 = scmp.ne.s32.totalorder %s68, %s71
      %p80 = scmp.eq.s32.totalorder %s37, 1
      %p81 = por %p79, %p80
      %p82 = scmp.ne.s32.totalorder %s71, %s72
      %p83 = scmp.eq.s32.totalorder %s37, 0
      %p84 = por %p82, %p83
      %p85 = scmp.ne.s32.totalorder %s71, %s72
      %p86 = scmp.eq.s32.totalorder %s38, 1
      %p87 = por %p85, %p86
      %p89 = scmp.ne.s32.totalorder %s72, %s88
      %p90 = scmp.eq.s32.totalorder %s38, 0
      %p91 = por %p89, %p90
      %s92 = ssub.s32 %s32, %s39
      %p93 = scmp.eq.s32.totalorder %s92, 0
      %s95 = sadd.s32 %s94, 1
      %s96 = scalar_select %p93, %s94, %s95
      %p99 = pneg %p93
      %p100 = scmp.eq.s32.totalorder %s32, 1
      %p101 = por %p99, %p100
      %p102 = scmp.ne.s32.totalorder %s94, %s97
      %p103 = scmp.eq.s32.totalorder %s32, 0
      %p104 = por %p102, %p103
      %p105 = scmp.ne.s32.totalorder %s94, %s97
      %p106 = scmp.eq.s32.totalorder %s37, 1
      %p107 = por %p105, %p106
      %p108 = scmp.ne.s32.totalorder %s97, %s98
      %p109 = scmp.eq.s32.totalorder %s37, 0
      %p110 = por %p108, %p109
      %p111 = scmp.ne.s32.totalorder %s97, %s98
      %p112 = scmp.eq.s32.totalorder %s38, 1
      %p113 = por %p111, %p112
      %p115 = scmp.ne.s32.totalorder %s98, %s114
      %p116 = scmp.eq.s32.totalorder %s38, 0
      %p117 = por %p115, %p116
      %s119 = sadd.s32 %s118, 1
      %p122 = scmp.eq.s32.totalorder %s32, 1
      %p123 = scmp.ne.s32.totalorder %s118, %s120
      %p124 = scmp.eq.s32.totalorder %s32, 0
      %p125 = por %p123, %p124
      %p126 = scmp.ne.s32.totalorder %s118, %s120
      %p127 = scmp.eq.s32.totalorder %s37, 1
      %p128 = por %p126, %p127
      %p129 = scmp.ne.s32.totalorder %s120, %s121
      %p130 = scmp.eq.s32.totalorder %s37, 0
      %p131 = por %p129, %p130
      %p132 = scmp.ne.s32.totalorder %s120, %s121
      %p133 = scmp.eq.s32.totalorder %s38, 1
      %p134 = por %p132, %p133
      %p136 = scmp.ne.s32.totalorder %s121, %s135
      %p137 = scmp.eq.s32.totalorder %s38, 0
      %p138 = por %p136, %p137
      %s140 = sadd.s32 %s139, 1
      %p143 = scmp.eq.s32.totalorder %s32, 1
      %p144 = scmp.ne.s32.totalorder %s139, %s141
      %p145 = scmp.eq.s32.totalorder %s32, 0
      %p146 = por %p144, %p145
      %p147 = scmp.ne.s32.totalorder %s139, %s141
      %p148 = scmp.eq.s32.totalorder %s37, 1
      %p149 = por %p147, %p148
      %p150 = scmp.ne.s32.totalorder %s141, %s142
      %p151 = scmp.eq.s32.totalorder %s37, 0
      %p152 = por %p150, %p151
      %p153 = scmp.ne.s32.totalorder %s141, %s142
      %p154 = scmp.eq.s32.totalorder %s38, 1
      %p155 = por %p153, %p154
      %p157 = scmp.ne.s32.totalorder %s142, %s156
      %p158 = scmp.eq.s32.totalorder %s38, 0
      %p159 = por %p157, %p158
      %s161 = sadd.s32 %s160, 1
      %p164 = scmp.eq.s32.totalorder %s32, 1
      %p165 = scmp.ne.s32.totalorder %s160, %s162
      %p166 = scmp.eq.s32.totalorder %s32, 0
      %p167 = por %p165, %p166
      %p168 = scmp.ne.s32.totalorder %s160, %s162
      %p169 = scmp.eq.s32.totalorder %s37, 1
      %p170 = por %p168, %p169
      %p171 = scmp.ne.s32.totalorder %s162, %s163
      %p172 = scmp.eq.s32.totalorder %s37, 0
      %p173 = por %p171, %p172
      %p174 = scmp.ne.s32.totalorder %s162, %s163
      %p175 = scmp.eq.s32.totalorder %s38, 1
      %p176 = por %p174, %p175
      %p178 = scmp.ne.s32.totalorder %s163, %s177
      %p179 = scmp.eq.s32.totalorder %s38, 0
      %p180 = por %p178, %p179
      %s182 = sadd.s32 %s181, 1
      %p185 = scmp.eq.s32.totalorder %s32, 1
      %p186 = scmp.ne.s32.totalorder %s181, %s183
      %p187 = scmp.eq.s32.totalorder %s32, 0
      %p188 = por %p186, %p187
      %p189 = scmp.ne.s32.totalorder %s181, %s183
      %p190 = scmp.eq.s32.totalorder %s37, 1
      %p191 = por %p189, %p190
      %p192 = scmp.ne.s32.totalorder %s183, %s184
      %p193 = scmp.eq.s32.totalorder %s37, 0
      %p194 = por %p192, %p193
      %p195 = scmp.ne.s32.totalorder %s183, %s184
      %p196 = scmp.eq.s32.totalorder %s38, 1
      %p197 = por %p195, %p196
      %p199 = scmp.ne.s32.totalorder %s184, %s198
      %p200 = scmp.eq.s32.totalorder %s38, 0
      %p201 = por %p199, %p200
      %s203 = sadd.s32 %s202, 1
      %p206 = scmp.eq.s32.totalorder %s32, 1
      %p207 = scmp.ne.s32.totalorder %s202, %s204
      %p208 = scmp.eq.s32.totalorder %s32, 0
      %p209 = por %p207, %p208
      %p210 = scmp.ne.s32.totalorder %s202, %s204
      %p211 = scmp.eq.s32.totalorder %s37, 1
      %p212 = por %p210, %p211
      %p213 = scmp.ne.s32.totalorder %s204, %s205
      %p214 = scmp.eq.s32.totalorder %s37, 0
      %p215 = por %p213, %p214
      %p216 = scmp.ne.s32.totalorder %s204, %s205
      %p217 = scmp.eq.s32.totalorder %s38, 1
      %p218 = por %p216, %p217
      %p220 = scmp.ne.s32.totalorder %s205, %s219
      %p221 = scmp.eq.s32.totalorder %s38, 0
      %p222 = por %p220, %p221
      %s224 = sadd.s32 %s223, 1
      %p227 = scmp.eq.s32.totalorder %s32, 1
      %p228 = scmp.ne.s32.totalorder %s223, %s225
      %p229 = scmp.eq.s32.totalorder %s32, 0
      %p230 = por %p228, %p229
      %p231 = scmp.ne.s32.totalorder %s223, %s225
      %p232 = scmp.eq.s32.totalorder %s37, 1
      %p233 = por %p231, %p232
      %p234 = scmp.ne.s32.totalorder %s225, %s226
      %p235 = scmp.eq.s32.totalorder %s37, 0
      %p236 = por %p234, %p235
      %p237 = scmp.ne.s32.totalorder %s225, %s226
      %p238 = scmp.eq.s32.totalorder %s38, 1
      %p239 = por %p237, %p238
      %p241 = scmp.ne.s32.totalorder %s226, %s240
      %p242 = scmp.eq.s32.totalorder %s38, 0
      %p243 = por %p241, %p242
      %s244 = ssub.s32 %s32, %s39
      %p245 = scmp.eq.s32.totalorder %s244, 0
      %s247 = sadd.s32 %s246, 1
      %s248 = scalar_select %p245, %s246, %s247
      %p251 = pneg %p245
      %p252 = scmp.eq.s32.totalorder %s32, 1
      %p253 = por %p251, %p252
      %p254 = scmp.ne.s32.totalorder %s246, %s249
      %p255 = scmp.eq.s32.totalorder %s32, 0
      %p256 = por %p254, %p255
      %p257 = scmp.ne.s32.totalorder %s246, %s249
      %p258 = scmp.eq.s32.totalorder %s37, 1
      %p259 = por %p257, %p258
      %p260 = scmp.ne.s32.totalorder %s249, %s250
      %p261 = scmp.eq.s32.totalorder %s37, 0
      %p262 = por %p260, %p261
      %p263 = scmp.ne.s32.totalorder %s249, %s250
      %p264 = scmp.eq.s32.totalorder %s38, 1
      %p265 = por %p263, %p264
      %p267 = scmp.ne.s32.totalorder %s250, %s266
      %p268 = scmp.eq.s32.totalorder %s38, 0
      %p269 = por %p267, %p268
      %s270 = ssub.s32 %s32, %s39
      %p271 = scmp.eq.s32.totalorder %s270, 0
      %s273 = sadd.s32 %s272, 1
      %s274 = scalar_select %p271, %s272, %s273
      %p277 = pneg %p271
      %p278 = scmp.eq.s32.totalorder %s32, 1
      %p279 = por %p277, %p278
      %p280 = scmp.ne.s32.totalorder %s272, %s275
      %p281 = scmp.eq.s32.totalorder %s32, 0
      %p282 = por %p280, %p281
      %p283 = scmp.ne.s32.totalorder %s272, %s275
      %p284 = scmp.eq.s32.totalorder %s37, 1
      %p285 = por %p283, %p284
      %p286 = scmp.ne.s32.totalorder %s275, %s276
      %p287 = scmp.eq.s32.totalorder %s37, 0
      %p288 = por %p286, %p287
      %p289 = scmp.ne.s32.totalorder %s275, %s276
      %p290 = scmp.eq.s32.totalorder %s38, 1
      %p291 = por %p289, %p290
      %p293 = scmp.ne.s32.totalorder %s276, %s292
      %p294 = scmp.eq.s32.totalorder %s38, 0
      %p295 = por %p293, %p294
      %s296 = ssub.s32 %s32, %s39
      %p297 = scmp.eq.s32.totalorder %s296, 0
      %s299 = sadd.s32 %s298, 1
      %s300 = scalar_select %p297, %s298, %s299
      %p303 = pneg %p297
      %p304 = scmp.eq.s32.totalorder %s32, 1
      %p305 = por %p303, %p304
      %p306 = scmp.ne.s32.totalorder %s298, %s301
      %p307 = scmp.eq.s32.totalorder %s32, 0
      %p308 = por %p306, %p307
      %p309 = scmp.ne.s32.totalorder %s298, %s301
      %p310 = scmp.eq.s32.totalorder %s37, 1
      %p311 = por %p309, %p310
      %p312 = scmp.ne.s32.totalorder %s301, %s302
      %p313 = scmp.eq.s32.totalorder %s37, 0
      %p314 = por %p312, %p313
      %p315 = scmp.ne.s32.totalorder %s301, %s302
      %p316 = scmp.eq.s32.totalorder %s38, 1
      %p317 = por %p315, %p316
      %p319 = scmp.ne.s32.totalorder %s302, %s318
      %p320 = scmp.eq.s32.totalorder %s38, 0
      %p321 = por %p319, %p320
      %p322 = scmp.le.s32.totalorder 1, %s32
      %p323 = scmp.lt.s32.totalorder %s32, 3
      %p324 = pnand %p322, %p323
      %p325 = pneg %p324
      // Predicated region
      $region9: #{tpu_custom_call.1} parent=5 // pred_check
        _
      $region10: #{tpu_custom_call.1} parent=5 // pred_check_branch
        %327 = sbr.rel (%p324) target = $region12
      $region11: #{tpu_custom_call.1} parent=5 // pred_region
        %s328 = ssub.s32 %s32, 1
        // Predicated region
        $region13: #{tpu_custom_call.1} parent=11 // pred_check
          %p329 = pneg %p131
        $region14: #{tpu_custom_call.1} parent=11 // pred_check_branch
          %331 = sbr.rel (%p329) target = $region16
        $region15: #{tpu_custom_call.1} parent=11 // pred_region
          %s333 = ssub.s32 512, 512
          %334 = vsyncadd [#allocation9], %s333
          %s335 = sshll.u32 [#allocation8], 4
          %s336 = int_to_ptr.vmem [resolvable:$true] %s335
          %341 = dma.hbm_to_vmem [thread:$0]  %s3, 512, %s336, [#allocation9], 128, 128, 8
        $region16: #{tpu_custom_call.1} parent=11 // pred_fallthru
          _
        // Predicated region
        $region17: #{tpu_custom_call.1} parent=11 // pred_check
          %p342 = pneg %p152
        $region18: #{tpu_custom_call.1} parent=11 // pred_check_branch
          %344 = sbr.rel (%p342) target = $region20
        $region19: #{tpu_custom_call.1} parent=11 // pred_region
          %s346 = ssub.s32 512, 512
          %347 = vsyncadd [#allocation9], %s346
          %s348 = sshll.u32 [#allocation10], 4
          %s349 = int_to_ptr.vmem [resolvable:$true] %s348
          %354 = dma.hbm_to_vmem [thread:$0]  %s4, 512, %s349, [#allocation9], 128, 128, 8
        $region20: #{tpu_custom_call.1} parent=11 // pred_fallthru
          _
        // Predicated region
        $region21: #{tpu_custom_call.1} parent=11 // pred_check
          %p355 = pneg %p173
        $region22: #{tpu_custom_call.1} parent=11 // pred_check_branch
          %357 = sbr.rel (%p355) target = $region24
        $region23: #{tpu_custom_call.1} parent=11 // pred_region
          %s359 = ssub.s32 512, 512
          %360 = vsyncadd [#allocation12], %s359
          %s361 = sshll.u32 [#allocation11], 4
          %s362 = int_to_ptr.vmem [resolvable:$true] %s361
          %367 = dma.hbm_to_vmem [thread:$0]  %s5, 512, %s362, [#allocation12], 128, 128, 8
        $region24: #{tpu_custom_call.1} parent=11 // pred_fallthru
          _
        // Predicated region
        $region25: #{tpu_custom_call.1} parent=11 // pred_check
          %p368 = pneg %p194
        $region26: #{tpu_custom_call.1} parent=11 // pred_check_branch
          %370 = sbr.rel (%p368) target = $region28
        $region27: #{tpu_custom_call.1} parent=11 // pred_region
          _
        $region28: #{tpu_custom_call.1} parent=11 // pred_fallthru
          _
        // Predicated region
        $region29: #{tpu_custom_call.1} parent=11 // pred_check
          %p371 = pneg %p215
        $region30: #{tpu_custom_call.1} parent=11 // pred_check_branch
          %373 = sbr.rel (%p371) target = $region32
        $region31: #{tpu_custom_call.1} parent=11 // pred_region
          _
        $region32: #{tpu_custom_call.1} parent=11 // pred_fallthru
          _
        // Predicated region
        $region33: #{tpu_custom_call.1} parent=11 // pred_check
          %p374 = pneg %p236
        $region34: #{tpu_custom_call.1} parent=11 // pred_check_branch
          %376 = sbr.rel (%p374) target = $region36
        $region35: #{tpu_custom_call.1} parent=11 // pred_region
          _
        $region36: #{tpu_custom_call.1} parent=11 // pred_fallthru
          _
      $region12: #{tpu_custom_call.1} parent=5 // pred_fallthru
        _
      %p377 = scmp.lt.s32.totalorder %s32, 2
      // Predicated region
      $region37: #{tpu_custom_call.1} parent=5 // pred_check
        %p378 = pneg %p377
      $region38: #{tpu_custom_call.1} parent=5 // pred_check_branch
        %380 = sbr.rel (%p378) target = $region40
      $region39: #{tpu_custom_call.1} parent=5 // pred_region
        // Predicated region
        $region41: #{tpu_custom_call.1} parent=39 // pred_check
          %p381 = pneg %p52
        $region42: #{tpu_custom_call.1} parent=39 // pred_check_branch
          %383 = sbr.rel (%p381) target = $region44
        $region43: #{tpu_custom_call.1} parent=39 // pred_region
          %s384 = sand.u32 %s42, 1
          %s385 = scalar_lea.sflag [#allocation3], %s384
          %s386 = sand.u32 %s42, 1
          %s387 = smul.addr %s386, 8
          %s388 = scalar_lea.vmem [#allocation2], %s387
          %s390 = ssub.s32 128, 128
          %391 = vsyncadd %s385, %s390
          %s392 = smul.addr %s32, 128
          %s393 = scalar_lea.hbm %s0, %s392
          %s395 = sshll.u32 %s388, 4
          %s396 = int_to_ptr.vmem [resolvable:$true] %s395
          %398 = dma.hbm_to_vmem [thread:$0]  %s393, 128, %s396, %s385
        $region44: #{tpu_custom_call.1} parent=39 // pred_fallthru
          _
        // Predicated region
        $region45: #{tpu_custom_call.1} parent=39 // pred_check
          %p399 = pneg %p78
        $region46: #{tpu_custom_call.1} parent=39 // pred_check_branch
          %401 = sbr.rel (%p399) target = $region48
        $region47: #{tpu_custom_call.1} parent=39 // pred_region
          %s402 = sand.u32 %s32, 1
          %s403 = scalar_lea.sflag [#allocation6], %s402
          %s404 = sand.u32 %s68, 1
          %s405 = smul.addr %s404, 8
          %s406 = scalar_lea.vmem [#allocation5], %s405
          %s408 = ssub.s32 128, 128
          %409 = vsyncadd %s403, %s408
          %s410 = smul.addr %s32, 128
          %s411 = scalar_lea.hbm %s1, %s410
          %s413 = sshll.u32 %s406, 4
          %s414 = int_to_ptr.vmem [resolvable:$true] %s413
          %416 = dma.hbm_to_vmem [thread:$0]  %s411, 128, %s414, %s403
        $region48: #{tpu_custom_call.1} parent=39 // pred_fallthru
          _
        // Predicated region
        $region49: #{tpu_custom_call.1} parent=39 // pred_check
          %p417 = pneg %p104
        $region50: #{tpu_custom_call.1} parent=39 // pred_check_branch
          %419 = sbr.rel (%p417) target = $region52
        $region51: #{tpu_custom_call.1} parent=39 // pred_region
          %s420 = sand.u32 %s32, 1
          %s421 = scalar_lea.sflag [#allocation6], %s420
          %s422 = sand.u32 %s94, 1
          %s423 = smul.addr %s422, 8
          %s424 = scalar_lea.vmem [#allocation7], %s423
          %s426 = ssub.s32 128, 128
          %427 = vsyncadd %s421, %s426
          %s428 = smul.addr %s32, 128
          %s429 = scalar_lea.hbm %s2, %s428
          %s431 = sshll.u32 %s424, 4
          %s432 = int_to_ptr.vmem [resolvable:$true] %s431
          %434 = dma.hbm_to_vmem [thread:$0]  %s429, 128, %s432, %s421
        $region52: #{tpu_custom_call.1} parent=39 // pred_fallthru
          _
        // Predicated region
        $region53: #{tpu_custom_call.1} parent=39 // pred_check
          %p435 = pneg %p256
        $region54: #{tpu_custom_call.1} parent=39 // pred_check_branch
          %437 = sbr.rel (%p435) target = $region56
        $region55: #{tpu_custom_call.1} parent=39 // pred_region
          %p438 = scmp.lt.s32.totalorder %s32, 1
          %s439 = scalar_select %p438, %s32, 1
          %s440 = smul.addr %s439, 2
          %s441 = scalar_lea.vmem %s9, %s440
        $region56: #{tpu_custom_call.1} parent=39 // pred_fallthru
          _
      $region40: #{tpu_custom_call.1} parent=5 // pred_fallthru
        _
      %p442 = scmp.le.s32.totalorder 1, %s32
      %p443 = scmp.lt.s32.totalorder %s32, 3
      %p444 = pnand %p442, %p443
      %p445 = pneg %p444
      // Predicated region
      $region57: #{tpu_custom_call.1} parent=5 // pred_check
        _
      $region58: #{tpu_custom_call.1} parent=5 // pred_check_branch
        %447 = sbr.rel (%p444) target = $region60
      $region59: #{tpu_custom_call.1} parent=5 // pred_region
        %s448 = ssub.s32 %s32, 1
        %s449 = sand.u32 %s45, 1
        %s450 = scalar_lea.sflag [#allocation3], %s449
        %s451 = sand.u32 %s45, 1
        %s452 = smul.addr %s451, 8
        %s453 = scalar_lea.vmem [#allocation2], %s452
        // Predicated region
        $region61: #{tpu_custom_call.1} parent=59 // pred_check
          %p454 = pneg %p58
        $region62: #{tpu_custom_call.1} parent=59 // pred_check_branch
          %456 = sbr.rel (%p454) target = $region64
        $region63: #{tpu_custom_call.1} parent=59 // pred_region
          %457 = dma.done %s450, 128
        $region64: #{tpu_custom_call.1} parent=59 // pred_fallthru
          _
        %s458 = sand.u32 %s37, 1
        %s459 = scalar_lea.sflag [#allocation6], %s458
        %s460 = sand.u32 %s71, 1
        %s461 = smul.addr %s460, 8
        %s462 = scalar_lea.vmem [#allocation5], %s461
        // Predicated region
        $region65: #{tpu_custom_call.1} parent=59 // pred_check
          %p463 = pneg %p84
        $region66: #{tpu_custom_call.1} parent=59 // pred_check_branch
          %465 = sbr.rel (%p463) target = $region68
        $region67: #{tpu_custom_call.1} parent=59 // pred_region
          %466 = dma.done %s459, 128
        $region68: #{tpu_custom_call.1} parent=59 // pred_fallthru
          _
        %s467 = sand.u32 %s37, 1
        %s468 = scalar_lea.sflag [#allocation6], %s467
        %s469 = sand.u32 %s97, 1
        %s470 = smul.addr %s469, 8
        %s471 = scalar_lea.vmem [#allocation7], %s470
        // Predicated region
        $region69: #{tpu_custom_call.1} parent=59 // pred_check
          %p472 = pneg %p110
        $region70: #{tpu_custom_call.1} parent=59 // pred_check_branch
          %474 = sbr.rel (%p472) target = $region72
        $region71: #{tpu_custom_call.1} parent=59 // pred_region
          %475 = dma.done %s468, 128
        $region72: #{tpu_custom_call.1} parent=59 // pred_fallthru
          _
        // Predicated region
        $region73: #{tpu_custom_call.1} parent=59 // pred_check
          %p476 = pneg %p131
        $region74: #{tpu_custom_call.1} parent=59 // pred_check_branch
          %478 = sbr.rel (%p476) target = $region76
        $region75: #{tpu_custom_call.1} parent=59 // pred_region
          %479 = dma.done [#allocation9], 512
        $region76: #{tpu_custom_call.1} parent=59 // pred_fallthru
          _
        // Predicated region
        $region77: #{tpu_custom_call.1} parent=59 // pred_check
          %p480 = pneg %p152
        $region78: #{tpu_custom_call.1} parent=59 // pred_check_branch
          %482 = sbr.rel (%p480) target = $region80
        $region79: #{tpu_custom_call.1} parent=59 // pred_region
          %483 = dma.done [#allocation9], 512
        $region80: #{tpu_custom_call.1} parent=59 // pred_fallthru
          _
        // Predicated region
        $region81: #{tpu_custom_call.1} parent=59 // pred_check
          %p484 = pneg %p173
        $region82: #{tpu_custom_call.1} parent=59 // pred_check_branch
          %486 = sbr.rel (%p484) target = $region84
        $region83: #{tpu_custom_call.1} parent=59 // pred_region
          %487 = dma.done [#allocation12], 512
        $region84: #{tpu_custom_call.1} parent=59 // pred_fallthru
          _
        %s488 = sand.u32 %s45, 1
        %s489 = scalar_lea.sflag [#allocation3], %s488
        %s490 = sand.u32 %s45, 1
        %s491 = smul.addr %s490, 8
        %s492 = scalar_lea.vmem [#allocation2], %s491
        %p493 = pneg %p58
        %p494 = pneg %p55
        %s495 = sand.u32 %s37, 1
        %s496 = scalar_lea.sflag [#allocation6], %s495
        %s497 = sand.u32 %s71, 1
        %s498 = smul.addr %s497, 8
        %s499 = scalar_lea.vmem [#allocation5], %s498
        %p500 = pneg %p84
        %p501 = pneg %p81
        %s502 = sand.u32 %s37, 1
        %s503 = scalar_lea.sflag [#allocation6], %s502
        %s504 = sand.u32 %s97, 1
        %s505 = smul.addr %s504, 8
        %s506 = scalar_lea.vmem [#allocation7], %s505
        %p507 = pneg %p110
        %p508 = pneg %p107
        %p509 = pneg %p131
        %p510 = pneg %p128
        %p511 = pneg %p152
        %p512 = pneg %p149
        %p513 = pneg %p173
        %p514 = pneg %p170
        %p515 = pneg %p194
        %p516 = pneg %p191
        %p517 = pneg %p215
        %p518 = pneg %p212
        %p519 = pneg %p236
        %p520 = pneg %p233
        %p521 = scmp.lt.s32.totalorder %s37, 1
        %s522 = scalar_select %p521, %s37, 1
        %s523 = smul.addr %s522, 2
        %s524 = scalar_lea.vmem %s9, %s523
        %p525 = pneg %p262
        %p526 = pneg %p259
        %p527 = pneg %p288
        %p528 = pneg %p285
        %s529 = sand.u32 %s275, 1
        %s530 = scalar_lea.sflag [#allocation4], %s529
        %s531 = sand.u32 %s275, 1
        %s532 = smul.addr %s531, 8
        %s533 = scalar_lea.vmem [#allocation13], %s532
        %p534 = pneg %p314
        %p535 = pneg %p311
        %s536 = sand.u32 %s301, 1
        %s537 = scalar_lea.sflag [#allocation15], %s536
        %s538 = sand.u32 %s301, 1
        %s539 = smul.addr %s538, 16
        %s540 = scalar_lea.vmem [#allocation14], %s539
        %p541 = scmp.lt.s32.totalorder %s37, 1
        %s542 = scalar_select %p541, %s37, 1
        %s543 = smul.addr %s542, 2
        %s544 = scalar_lea.vmem %s9, %s543
        %v545 = vld [vmem:[%s453] sm:$0xff]
        %v546 = vld [vmem:[#allocation8] sm:$0xff]
        %v547 = vld [vmem:[#allocation8 + $0x8] sm:$0xff]
        %v548 = vld [vmem:[#allocation8 + $0x10] sm:$0xff]
        %v549 = vld [vmem:[#allocation8 + $0x18] sm:$0xff]
        %v550 = vld [vmem:[%s6] sm:$0x1]
        %v552 = vlaneseq
        %v553 = vshrl.u32 %v552, 7
        %v554 = vsub.s32 0, %v553
        %v555 = vrot.slane %v550, %v554
        %vm557 = vcmask 261120
        %v559 = vsel %vm557, %v545, 0
        %561 = vmatprep.subr.mxu0 0.0
        %562 = vmatpush1.msra.mxu0 %v546
        %563 = vmatprep.subr.mxu0 0.0
        %564 = vmatpush1.msra.mxu0 %v547
        %565 = vmatprep.subr.mxu0 0.0
        %566 = vmatpush1.msra.mxu0 %v548
        %567 = vmatprep.subr.mxu0 0.0
        %568 = vmatpush1.msra.mxu0 %v549
        %569 = vmatprep.subr.mxu0 0.0
        %570 = vmatpush1.msra.mxu0 0.0
        %571 = vmatprep.subr.mxu0 0.0
        %572 = vmatpush1.msra.mxu0 0.0
        %573 = vmatprep.subr.mxu0 0.0
        %574 = vmatpush1.msra.mxu0 0.0
        %575 = vmatprep.subr.mxu0 0.0
        %576 = vmatpush1.msra.mxu0 0.0
        %577 = vmatprep.subr.mxu0 0.0
        %578 = vmatpush1.msra.mxu0 0.0
        %579 = vmatprep.subr.mxu0 0.0
        %580 = vmatpush1.msra.mxu0 0.0
        %581 = vmatprep.subr.mxu0 0.0
        %582 = vmatpush1.msra.mxu0 0.0
        %583 = vmatprep.subr.mxu0 0.0
        %584 = vmatpush1.msra.mxu0 0.0
        %585 = vmatprep.subr.mxu0 0.0
        %586 = vmatpush1.msra.mxu0 0.0
        %587 = vmatprep.subr.mxu0 0.0
        %588 = vmatpush1.msra.mxu0 0.0
        %589 = vmatprep.subr.mxu0 0.0
        %590 = vmatpush1.msra.mxu0 0.0
        %591 = vmatprep.subr.mxu0 0.0
        %592 = vmatpush1.msra.mxu0 0.0
        %593 = vmatprep.subr.mxu0 0.0
        %594 = vmatpush1.msra.mxu0 0.0
        %595 = vmatprep.subr.mxu0 0.0
        %596 = vmatpush1.msra.mxu0 0.0
        %597 = vmatprep.subr.mxu0 0.0
        %598 = vmatpush1.msra.mxu0 0.0
        %599 = vmatprep.subr.mxu0 0.0
        %600 = vmatpush1.msra.mxu0 0.0
        %601 = vmatprep.subr.mxu0 0.0
        %602 = vmatpush1.msra.mxu0 0.0
        %603 = vmatprep.subr.mxu0 0.0
        %604 = vmatpush1.msra.mxu0 0.0
        %605 = vmatprep.subr.mxu0 0.0
        %606 = vmatpush1.msra.mxu0 0.0
        %607 = vmatprep.subr.mxu0 0.0
        %608 = vmatpush1.msra.mxu0 0.0
        %609 = vmatprep.subr.mxu0 0.0
        %610 = vmatpush1.msra.mxu0 0.0
        %611 = vmatprep.subr.mxu0 0.0
        %612 = vmatpush1.msra.mxu0 0.0
        %613 = vmatprep.subr.mxu0 0.0
        %614 = vmatpush1.msra.mxu0 0.0
        %615 = vmatprep.subr.mxu0 0.0
        %616 = vmatpush1.msra.mxu0 0.0
        %617 = vmatprep.subr.mxu0 0.0
        %618 = vmatpush1.msra.mxu0 0.0
        %619 = vmatprep.subr.mxu0 0.0
        %620 = vmatpush1.msra.mxu0 0.0
        %621 = vmatprep.subr.mxu0 0.0
        %622 = vmatpush1.msra.mxu0 0.0
        %623 = vmatprep.subr.mxu0 0.0
        %624 = vmatpush1.msra.mxu0 0.0
        %625 = vmatprep.mubr.f32.mxu0 0.0
        %626 = vmatmul.mubr.f32.gmra.mrb[0].mxu0 %v559
        %v627 = vpop.f32.mrb[0].mxu0
        %v628 = vadd.f32 %v555, %v627
        %v629 = vpop.f32.mrb[0].mxu0
        %630 = vdwg.mxu0
        %v631 = vld [vmem:[%s462] sm:$0xff]
        %v632 = vld [vmem:[#allocation10] sm:$0xff]
        %v633 = vld [vmem:[#allocation10 + $0x8] sm:$0xff]
        %v634 = vld [vmem:[#allocation10 + $0x10] sm:$0xff]
        %v635 = vld [vmem:[#allocation10 + $0x18] sm:$0xff]
        %v636 = vld [vmem:[%s7] sm:$0x1]
        %v638 = vlaneseq
        %v639 = vshrl.u32 %v638, 7
        %v640 = vsub.s32 0, %v639
        %v641 = vrot.slane %v636, %v640
        %v644 = vsel %vm557, %v631, 0
        %646 = vmatprep.subr.mxu0 0.0
        %647 = vmatpush1.msra.mxu0 %v632
        %648 = vmatprep.subr.mxu0 0.0
        %649 = vmatpush1.msra.mxu0 %v633
        %650 = vmatprep.subr.mxu0 0.0
        %651 = vmatpush1.msra.mxu0 %v634
        %652 = vmatprep.subr.mxu0 0.0
        %653 = vmatpush1.msra.mxu0 %v635
        %654 = vmatprep.subr.mxu0 0.0
        %655 = vmatpush1.msra.mxu0 0.0
        %656 = vmatprep.subr.mxu0 0.0
        %657 = vmatpush1.msra.mxu0 0.0
        %658 = vmatprep.subr.mxu0 0.0
        %659 = vmatpush1.msra.mxu0 0.0
        %660 = vmatprep.subr.mxu0 0.0
        %661 = vmatpush1.msra.mxu0 0.0
        %662 = vmatprep.subr.mxu0 0.0
        %663 = vmatpush1.msra.mxu0 0.0
        %664 = vmatprep.subr.mxu0 0.0
        %665 = vmatpush1.msra.mxu0 0.0
        %666 = vmatprep.subr.mxu0 0.0
        %667 = vmatpush1.msra.mxu0 0.0
        %668 = vmatprep.subr.mxu0 0.0
        %669 = vmatpush1.msra.mxu0 0.0
        %670 = vmatprep.subr.mxu0 0.0
        %671 = vmatpush1.msra.mxu0 0.0
        %672 = vmatprep.subr.mxu0 0.0
        %673 = vmatpush1.msra.mxu0 0.0
        %674 = vmatprep.subr.mxu0 0.0
        %675 = vmatpush1.msra.mxu0 0.0
        %676 = vmatprep.subr.mxu0 0.0
        %677 = vmatpush1.msra.mxu0 0.0
        %678 = vmatprep.subr.mxu0 0.0
        %679 = vmatpush1.msra.mxu0 0.0
        %680 = vmatprep.subr.mxu0 0.0
        %681 = vmatpush1.msra.mxu0 0.0
        %682 = vmatprep.subr.mxu0 0.0
        %683 = vmatpush1.msra.mxu0 0.0
        %684 = vmatprep.subr.mxu0 0.0
        %685 = vmatpush1.msra.mxu0 0.0
        %686 = vmatprep.subr.mxu0 0.0
        %687 = vmatpush1.msra.mxu0 0.0
        %688 = vmatprep.subr.mxu0 0.0
        %689 = vmatpush1.msra.mxu0 0.0
        %690 = vmatprep.subr.mxu0 0.0
        %691 = vmatpush1.msra.mxu0 0.0
        %692 = vmatprep.subr.mxu0 0.0
        %693 = vmatpush1.msra.mxu0 0.0
        %694 = vmatprep.subr.mxu0 0.0
        %695 = vmatpush1.msra.mxu0 0.0
        %696 = vmatprep.subr.mxu0 0.0
        %697 = vmatpush1.msra.mxu0 0.0
        %698 = vmatprep.subr.mxu0 0.0
        %699 = vmatpush1.msra.mxu0 0.0
        %700 = vmatprep.subr.mxu0 0.0
        %701 = vmatpush1.msra.mxu0 0.0
        %702 = vmatprep.subr.mxu0 0.0
        %703 = vmatpush1.msra.mxu0 0.0
        %704 = vmatprep.subr.mxu0 0.0
        %705 = vmatpush1.msra.mxu0 0.0
        %706 = vmatprep.subr.mxu0 0.0
        %707 = vmatpush1.msra.mxu0 0.0
        %708 = vmatprep.subr.mxu0 0.0
        %709 = vmatpush1.msra.mxu0 0.0
        %710 = vmatprep.mubr.f32.mxu0 0.0
        %711 = vmatmul.mubr.f32.gmra.mrb[0].mxu0 %v644
        %v712 = vpop.f32.mrb[0].mxu0
        %v713 = vadd.f32 %v641, %v712
        %v714 = vpop.f32.mrb[0].mxu0
        %715 = vdwg.mxu0
        %v716 = vld [vmem:[%s471] sm:$0xff]
        %v717 = vld [vmem:[#allocation11] sm:$0xff]
        %v718 = vld [vmem:[#allocation11 + $0x8] sm:$0xff]
        %v719 = vld [vmem:[#allocation11 + $0x10] sm:$0xff]
        %v720 = vld [vmem:[#allocation11 + $0x18] sm:$0xff]
        %v721 = vld [vmem:[%s8] sm:$0x1]
        %v723 = vlaneseq
        %v724 = vshrl.u32 %v723, 7
        %v725 = vsub.s32 0, %v724
        %v726 = vrot.slane %v721, %v725
        %v729 = vsel %vm557, %v716, 0
        %731 = vmatprep.subr.mxu0 0.0
        %732 = vmatpush1.msra.mxu0 %v717
        %733 = vmatprep.subr.mxu0 0.0
        %734 = vmatpush1.msra.mxu0 %v718
        %735 = vmatprep.subr.mxu0 0.0
        %736 = vmatpush1.msra.mxu0 %v719
        %737 = vmatprep.subr.mxu0 0.0
        %738 = vmatpush1.msra.mxu0 %v720
        %739 = vmatprep.subr.mxu0 0.0
        %740 = vmatpush1.msra.mxu0 0.0
        %741 = vmatprep.subr.mxu0 0.0
        %742 = vmatpush1.msra.mxu0 0.0
        %743 = vmatprep.subr.mxu0 0.0
        %744 = vmatpush1.msra.mxu0 0.0
        %745 = vmatprep.subr.mxu0 0.0
        %746 = vmatpush1.msra.mxu0 0.0
        %747 = vmatprep.subr.mxu0 0.0
        %748 = vmatpush1.msra.mxu0 0.0
        %749 = vmatprep.subr.mxu0 0.0
        %750 = vmatpush1.msra.mxu0 0.0
        %751 = vmatprep.subr.mxu0 0.0
        %752 = vmatpush1.msra.mxu0 0.0
        %753 = vmatprep.subr.mxu0 0.0
        %754 = vmatpush1.msra.mxu0 0.0
        %755 = vmatprep.subr.mxu0 0.0
        %756 = vmatpush1.msra.mxu0 0.0
        %757 = vmatprep.subr.mxu0 0.0
        %758 = vmatpush1.msra.mxu0 0.0
        %759 = vmatprep.subr.mxu0 0.0
        %760 = vmatpush1.msra.mxu0 0.0
        %761 = vmatprep.subr.mxu0 0.0
        %762 = vmatpush1.msra.mxu0 0.0
        %763 = vmatprep.subr.mxu0 0.0
        %764 = vmatpush1.msra.mxu0 0.0
        %765 = vmatprep.subr.mxu0 0.0
        %766 = vmatpush1.msra.mxu0 0.0
        %767 = vmatprep.subr.mxu0 0.0
        %768 = vmatpush1.msra.mxu0 0.0
        %769 = vmatprep.subr.mxu0 0.0
        %770 = vmatpush1.msra.mxu0 0.0
        %771 = vmatprep.subr.mxu0 0.0
        %772 = vmatpush1.msra.mxu0 0.0
        %773 = vmatprep.subr.mxu0 0.0
        %774 = vmatpush1.msra.mxu0 0.0
        %775 = vmatprep.subr.mxu0 0.0
        %776 = vmatpush1.msra.mxu0 0.0
        %777 = vmatprep.subr.mxu0 0.0
        %778 = vmatpush1.msra.mxu0 0.0
        %779 = vmatprep.subr.mxu0 0.0
        %780 = vmatpush1.msra.mxu0 0.0
        %781 = vmatprep.subr.mxu0 0.0
        %782 = vmatpush1.msra.mxu0 0.0
        %783 = vmatprep.subr.mxu0 0.0
        %784 = vmatpush1.msra.mxu0 0.0
        %785 = vmatprep.subr.mxu0 0.0
        %786 = vmatpush1.msra.mxu0 0.0
        %787 = vmatprep.subr.mxu0 0.0
        %788 = vmatpush1.msra.mxu0 0.0
        %789 = vmatprep.subr.mxu0 0.0
        %790 = vmatpush1.msra.mxu0 0.0
        %791 = vmatprep.subr.mxu0 0.0
        %792 = vmatpush1.msra.mxu0 0.0
        %793 = vmatprep.subr.mxu0 0.0
        %794 = vmatpush1.msra.mxu0 0.0
        %795 = vmatprep.mubr.f32.mxu0 0.0
        %796 = vmatmul.mubr.f32.gmra.mrb[0].mxu0 %v729
        %v797 = vpop.f32.mrb[0].mxu0
        %v798 = vadd.f32 %v726, %v797
        %v799 = vpop.f32.mrb[0].mxu0
        %800 = vdwg.mxu0
        %v801 = vld [vmem:[%s544] sm:$0x3]
        %v802 = vunpack.c.0.s8 %v801
        %vm803 = vcmp.ne.s32.totalorder %v802, 0
        %vm804 = vcmask 130048
        %v806 = vsel %vm804, %v628, 0
        %v809 = vsel %vm804, %v713, 0
        %811 = vmatprep.subr.mxu0 0.0
        %812 = vmatpush1.xpose.msra.mxu0 %v809
        %813 = vmatprep.subr.mxu0 0.0
        %814 = vmatpush1.xpose.msra.mxu0 0.0
        %815 = vmatprep.subr.mxu0 0.0
        %816 = vmatpush1.xpose.msra.mxu0 0.0
        %817 = vmatprep.subr.mxu0 0.0
        %818 = vmatpush1.xpose.msra.mxu0 0.0
        %819 = vmatprep.subr.mxu0 0.0
        %820 = vmatpush1.xpose.msra.mxu0 0.0
        %821 = vmatprep.subr.mxu0 0.0
        %822 = vmatpush1.xpose.msra.mxu0 0.0
        %823 = vmatprep.subr.mxu0 0.0
        %824 = vmatpush1.xpose.msra.mxu0 0.0
        %825 = vmatprep.subr.mxu0 0.0
        %826 = vmatpush1.xpose.msra.mxu0 0.0
        %827 = vmatprep.subr.mxu0 0.0
        %828 = vmatpush1.xpose.msra.mxu0 0.0
        %829 = vmatprep.subr.mxu0 0.0
        %830 = vmatpush1.xpose.msra.mxu0 0.0
        %831 = vmatprep.subr.mxu0 0.0
        %832 = vmatpush1.xpose.msra.mxu0 0.0
        %833 = vmatprep.subr.mxu0 0.0
        %834 = vmatpush1.xpose.msra.mxu0 0.0
        %835 = vmatprep.subr.mxu0 0.0
        %836 = vmatpush1.xpose.msra.mxu0 0.0
        %837 = vmatprep.subr.mxu0 0.0
        %838 = vmatpush1.xpose.msra.mxu0 0.0
        %839 = vmatprep.subr.mxu0 0.0
        %840 = vmatpush1.xpose.msra.mxu0 0.0
        %841 = vmatprep.subr.mxu0 0.0
        %842 = vmatpush1.xpose.msra.mxu0 0.0
        %843 = vmatprep.subr.mxu0 0.0
        %844 = vmatpush1.xpose.msra.mxu0 0.0
        %845 = vmatprep.subr.mxu0 0.0
        %846 = vmatpush1.xpose.msra.mxu0 0.0
        %847 = vmatprep.subr.mxu0 0.0
        %848 = vmatpush1.xpose.msra.mxu0 0.0
        %849 = vmatprep.subr.mxu0 0.0
        %850 = vmatpush1.xpose.msra.mxu0 0.0
        %851 = vmatprep.subr.mxu0 0.0
        %852 = vmatpush1.xpose.msra.mxu0 0.0
        %853 = vmatprep.subr.mxu0 0.0
        %854 = vmatpush1.xpose.msra.mxu0 0.0
        %855 = vmatprep.subr.mxu0 0.0
        %856 = vmatpush1.xpose.msra.mxu0 0.0
        %857 = vmatprep.subr.mxu0 0.0
        %858 = vmatpush1.xpose.msra.mxu0 0.0
        %859 = vmatprep.subr.mxu0 0.0
        %860 = vmatpush1.xpose.msra.mxu0 0.0
        %861 = vmatprep.subr.mxu0 0.0
        %862 = vmatpush1.xpose.msra.mxu0 0.0
        %863 = vmatprep.subr.mxu0 0.0
        %864 = vmatpush1.xpose.msra.mxu0 0.0
        %865 = vmatprep.subr.mxu0 0.0
        %866 = vmatpush1.xpose.msra.mxu0 0.0
        %867 = vmatprep.subr.mxu0 0.0
        %868 = vmatpush1.xpose.msra.mxu0 0.0
        %869 = vmatprep.subr.mxu0 0.0
        %870 = vmatpush1.xpose.msra.mxu0 0.0
        %871 = vmatprep.subr.mxu0 0.0
        %872 = vmatpush1.xpose.msra.mxu0 0.0
        %873 = vmatprep.subr.mxu0 0.0
        %874 = vmatpush1.xpose.msra.mxu0 0.0
        %875 = vmatprep.mubr.f32.mxu0 0.0
        %876 = vmatmul.mubr.f32.gmra.mrb[0].mxu0 %v806
        %v877 = vpop.f32.mrb[0].mxu0
        %v878 = vadd.f32 0.0, %v877
        %v879 = vpop.f32.mrb[0].mxu0
        %880 = vdwg.mxu0
        %v881 = vmul.f32 %v878, 0.25
        %v882 = vmul.f32 %v881, 1.442695
        %v883 = vpow.pop %v882
        %v884 = vsel %vm803, 0.0, %v883
        %vm885 = vcmask 64512
        %v886 = vsel %vm885, %v884, 0.0
        %887 = vadd.xlane.f32.xlu0 %v886
        %v888 = vpop.xlane.xlu0 %887
        %v889 = vadd.f32 %v888, 1e-10
        %v890 = vrcp.pop %v889
        %v891 = vmul.f32 %v889, %v890
        %v892 = vsub.f32 2.0, %v891
        %v893 = vmul.f32 %v890, %v892
        %v894 = vmul.f32 %v884, %v893
        %895 = vst.msk [vmem:[%s540] sm:$0xff] %vm885, %v894
        %v897 = vsel %vm885, %v894, 0
        %899 = vmatprep.subr.mxu0 0.0
        %900 = vmatpush1.msra.mxu0 %v798
        %901 = vmatprep.subr.mxu0 0.0
        %902 = vmatpush1.msra.mxu0 0.0
        %903 = vmatprep.subr.mxu0 0.0
        %904 = vmatpush1.msra.mxu0 0.0
        %905 = vmatprep.subr.mxu0 0.0
        %906 = vmatpush1.msra.mxu0 0.0
        %907 = vmatprep.subr.mxu0 0.0
        %908 = vmatpush1.msra.mxu0 0.0
        %909 = vmatprep.subr.mxu0 0.0
        %910 = vmatpush1.msra.mxu0 0.0
        %911 = vmatprep.subr.mxu0 0.0
        %912 = vmatpush1.msra.mxu0 0.0
        %913 = vmatprep.subr.mxu0 0.0
        %914 = vmatpush1.msra.mxu0 0.0
        %915 = vmatprep.subr.mxu0 0.0
        %916 = vmatpush1.msra.mxu0 0.0
        %917 = vmatprep.subr.mxu0 0.0
        %918 = vmatpush1.msra.mxu0 0.0
        %919 = vmatprep.subr.mxu0 0.0
        %920 = vmatpush1.msra.mxu0 0.0
        %921 = vmatprep.subr.mxu0 0.0
        %922 = vmatpush1.msra.mxu0 0.0
        %923 = vmatprep.subr.mxu0 0.0
        %924 = vmatpush1.msra.mxu0 0.0
        %925 = vmatprep.subr.mxu0 0.0
        %926 = vmatpush1.msra.mxu0 0.0
        %927 = vmatprep.subr.mxu0 0.0
        %928 = vmatpush1.msra.mxu0 0.0
        %929 = vmatprep.subr.mxu0 0.0
        %930 = vmatpush1.msra.mxu0 0.0
        %931 = vmatprep.subr.mxu0 0.0
        %932 = vmatpush1.msra.mxu0 0.0
        %933 = vmatprep.subr.mxu0 0.0
        %934 = vmatpush1.msra.mxu0 0.0
        %935 = vmatprep.subr.mxu0 0.0
        %936 = vmatpush1.msra.mxu0 0.0
        %937 = vmatprep.subr.mxu0 0.0
        %938 = vmatpush1.msra.mxu0 0.0
        %939 = vmatprep.subr.mxu0 0.0
        %940 = vmatpush1.msra.mxu0 0.0
        %941 = vmatprep.subr.mxu0 0.0
        %942 = vmatpush1.msra.mxu0 0.0
        %943 = vmatprep.subr.mxu0 0.0
        %944 = vmatpush1.msra.mxu0 0.0
        %945 = vmatprep.subr.mxu0 0.0
        %946 = vmatpush1.msra.mxu0 0.0
        %947 = vmatprep.subr.mxu0 0.0
        %948 = vmatpush1.msra.mxu0 0.0
        %949 = vmatprep.subr.mxu0 0.0
        %950 = vmatpush1.msra.mxu0 0.0
        %951 = vmatprep.subr.mxu0 0.0
        %952 = vmatpush1.msra.mxu0 0.0
        %953 = vmatprep.subr.mxu0 0.0
        %954 = vmatpush1.msra.mxu0 0.0
        %955 = vmatprep.subr.mxu0 0.0
        %956 = vmatpush1.msra.mxu0 0.0
        %957 = vmatprep.subr.mxu0 0.0
        %958 = vmatpush1.msra.mxu0 0.0
        %959 = vmatprep.subr.mxu0 0.0
        %960 = vmatpush1.msra.mxu0 0.0
        %961 = vmatprep.subr.mxu0 0.0
        %962 = vmatpush1.msra.mxu0 0.0
        %963 = vmatprep.mubr.f32.mxu0 0.0
        %964 = vmatmul.mubr.f32.gmra.mrb[0].mxu0 %v897
        %v965 = vpop.f32.mrb[0].mxu0
        %v966 = vadd.f32 0.0, %v965
        %v967 = vpop.f32.mrb[0].mxu0
        %968 = vdwg.mxu0
        %969 = vst.msk [vmem:[%s533] sm:$0xff] %vm804, %v966
        %970 = vrot.lane.b32.xlu0 %v628, 112
        %v971 = vpop.permute.xlu0 %970
        %972 = vrot.lane.b32.xlu0 %v713, 112
        %v973 = vpop.permute.xlu0 %972
        %v974 = vsel %vm804, %v971, 0
        %v976 = vsel %vm804, %v973, 0
        %978 = vmatprep.subr.mxu0 0.0
        %979 = vmatpush1.xpose.msra.mxu0 %v976
        %980 = vmatprep.subr.mxu0 0.0
        %981 = vmatpush1.xpose.msra.mxu0 0.0
        %982 = vmatprep.subr.mxu0 0.0
        %983 = vmatpush1.xpose.msra.mxu0 0.0
        %984 = vmatprep.subr.mxu0 0.0
        %985 = vmatpush1.xpose.msra.mxu0 0.0
        %986 = vmatprep.subr.mxu0 0.0
        %987 = vmatpush1.xpose.msra.mxu0 0.0
        %988 = vmatprep.subr.mxu0 0.0
        %989 = vmatpush1.xpose.msra.mxu0 0.0
        %990 = vmatprep.subr.mxu0 0.0
        %991 = vmatpush1.xpose.msra.mxu0 0.0
        %992 = vmatprep.subr.mxu0 0.0
        %993 = vmatpush1.xpose.msra.mxu0 0.0
        %994 = vmatprep.subr.mxu0 0.0
        %995 = vmatpush1.xpose.msra.mxu0 0.0
        %996 = vmatprep.subr.mxu0 0.0
        %997 = vmatpush1.xpose.msra.mxu0 0.0
        %998 = vmatprep.subr.mxu0 0.0
        %999 = vmatpush1.xpose.msra.mxu0 0.0
        %1000 = vmatprep.subr.mxu0 0.0
        %1001 = vmatpush1.xpose.msra.mxu0 0.0
        %1002 = vmatprep.subr.mxu0 0.0
        %1003 = vmatpush1.xpose.msra.mxu0 0.0
        %1004 = vmatprep.subr.mxu0 0.0
        %1005 = vmatpush1.xpose.msra.mxu0 0.0
        %1006 = vmatprep.subr.mxu0 0.0
        %1007 = vmatpush1.xpose.msra.mxu0 0.0
        %1008 = vmatprep.subr.mxu0 0.0
        %1009 = vmatpush1.xpose.msra.mxu0 0.0
        %1010 = vmatprep.subr.mxu0 0.0
        %1011 = vmatpush1.xpose.msra.mxu0 0.0
        %1012 = vmatprep.subr.mxu0 0.0
        %1013 = vmatpush1.xpose.msra.mxu0 0.0
        %1014 = vmatprep.subr.mxu0 0.0
        %1015 = vmatpush1.xpose.msra.mxu0 0.0
        %1016 = vmatprep.subr.mxu0 0.0
        %1017 = vmatpush1.xpose.msra.mxu0 0.0
        %1018 = vmatprep.subr.mxu0 0.0
        %1019 = vmatpush1.xpose.msra.mxu0 0.0
        %1020 = vmatprep.subr.mxu0 0.0
        %1021 = vmatpush1.xpose.msra.mxu0 0.0
        %1022 = vmatprep.subr.mxu0 0.0
        %1023 = vmatpush1.xpose.msra.mxu0 0.0
        %1024 = vmatprep.subr.mxu0 0.0
        %1025 = vmatpush1.xpose.msra.mxu0 0.0
        %1026 = vmatprep.subr.mxu0 0.0
        %1027 = vmatpush1.xpose.msra.mxu0 0.0
        %1028 = vmatprep.subr.mxu0 0.0
        %1029 = vmatpush1.xpose.msra.mxu0 0.0
        %1030 = vmatprep.subr.mxu0 0.0
        %1031 = vmatpush1.xpose.msra.mxu0 0.0
        %1032 = vmatprep.subr.mxu0 0.0
        %1033 = vmatpush1.xpose.msra.mxu0 0.0
        %1034 = vmatprep.subr.mxu0 0.0
        %1035 = vmatpush1.xpose.msra.mxu0 0.0
        %1036 = vmatprep.subr.mxu0 0.0
        %1037 = vmatpush1.xpose.msra.mxu0 0.0
        %1038 = vmatprep.subr.mxu0 0.0
        %1039 = vmatpush1.xpose.msra.mxu0 0.0
        %1040 = vmatprep.subr.mxu0 0.0
        %1041 = vmatpush1.xpose.msra.mxu0 0.0
        %1042 = vmatprep.mubr.f32.mxu0 0.0
        %1043 = vmatmul.mubr.f32.gmra.mrb[0].mxu0 %v974
        %v1044 = vpop.f32.mrb[0].mxu0
        %v1045 = vadd.f32 0.0, %v1044
        %v1046 = vpop.f32.mrb[0].mxu0
        %1047 = vdwg.mxu0
        %v1048 = vmul.f32 %v1045, 0.25
        %v1049 = vmul.f32 %v1048, 1.442695
        %v1050 = vpow.pop %v1049
        %v1051 = vsel %vm803, 0.0, %v1050
        %v1052 = vsel %vm885, %v1051, 0.0
        %1053 = vadd.xlane.f32.xlu0 %v1052
        %v1054 = vpop.xlane.xlu0 %1053
        %v1055 = vadd.f32 %v1054, 1e-10
        %v1056 = vrcp.pop %v1055
        %v1057 = vmul.f32 %v1055, %v1056
        %v1058 = vsub.f32 2.0, %v1057
        %v1059 = vmul.f32 %v1056, %v1058
        %v1060 = vmul.f32 %v1051, %v1059
        %s1061 = scalar_lea.vmem %s540, 8 [#allocation14]
        %1062 = vst.msk [vmem:[%s1061] sm:$0xff] %vm885, %v1060
        %1064 = vrot.lane.b32.xlu0 %v798, 112
        %v1065 = vpop.permute.xlu0 %1064
        %v1068 = vsel %vm885, %v1060, 0
        %1070 = vmatprep.subr.mxu0 0.0
        %1071 = vmatpush1.msra.mxu0 %v1065
        %1072 = vmatprep.subr.mxu0 0.0
        %1073 = vmatpush1.msra.mxu0 0.0
        %1074 = vmatprep.subr.mxu0 0.0
        %1075 = vmatpush1.msra.mxu0 0.0
        %1076 = vmatprep.subr.mxu0 0.0
        %1077 = vmatpush1.msra.mxu0 0.0
        %1078 = vmatprep.subr.mxu0 0.0
        %1079 = vmatpush1.msra.mxu0 0.0
        %1080 = vmatprep.subr.mxu0 0.0
        %1081 = vmatpush1.msra.mxu0 0.0
        %1082 = vmatprep.subr.mxu0 0.0
        %1083 = vmatpush1.msra.mxu0 0.0
        %1084 = vmatprep.subr.mxu0 0.0
        %1085 = vmatpush1.msra.mxu0 0.0
        %1086 = vmatprep.subr.mxu0 0.0
        %1087 = vmatpush1.msra.mxu0 0.0
        %1088 = vmatprep.subr.mxu0 0.0
        %1089 = vmatpush1.msra.mxu0 0.0
        %1090 = vmatprep.subr.mxu0 0.0
        %1091 = vmatpush1.msra.mxu0 0.0
        %1092 = vmatprep.subr.mxu0 0.0
        %1093 = vmatpush1.msra.mxu0 0.0
        %1094 = vmatprep.subr.mxu0 0.0
        %1095 = vmatpush1.msra.mxu0 0.0
        %1096 = vmatprep.subr.mxu0 0.0
        %1097 = vmatpush1.msra.mxu0 0.0
        %1098 = vmatprep.subr.mxu0 0.0
        %1099 = vmatpush1.msra.mxu0 0.0
        %1100 = vmatprep.subr.mxu0 0.0
        %1101 = vmatpush1.msra.mxu0 0.0
        %1102 = vmatprep.subr.mxu0 0.0
        %1103 = vmatpush1.msra.mxu0 0.0
        %1104 = vmatprep.subr.mxu0 0.0
        %1105 = vmatpush1.msra.mxu0 0.0
        %1106 = vmatprep.subr.mxu0 0.0
        %1107 = vmatpush1.msra.mxu0 0.0
        %1108 = vmatprep.subr.mxu0 0.0
        %1109 = vmatpush1.msra.mxu0 0.0
        %1110 = vmatprep.subr.mxu0 0.0
        %1111 = vmatpush1.msra.mxu0 0.0
        %1112 = vmatprep.subr.mxu0 0.0
        %1113 = vmatpush1.msra.mxu0 0.0
        %1114 = vmatprep.subr.mxu0 0.0
        %1115 = vmatpush1.msra.mxu0 0.0
        %1116 = vmatprep.subr.mxu0 0.0
        %1117 = vmatpush1.msra.mxu0 0.0
        %1118 = vmatprep.subr.mxu0 0.0
        %1119 = vmatpush1.msra.mxu0 0.0
        %1120 = vmatprep.subr.mxu0 0.0
        %1121 = vmatpush1.msra.mxu0 0.0
        %1122 = vmatprep.subr.mxu0 0.0
        %1123 = vmatpush1.msra.mxu0 0.0
        %1124 = vmatprep.subr.mxu0 0.0
        %1125 = vmatpush1.msra.mxu0 0.0
        %1126 = vmatprep.subr.mxu0 0.0
        %1127 = vmatpush1.msra.mxu0 0.0
        %1128 = vmatprep.subr.mxu0 0.0
        %1129 = vmatpush1.msra.mxu0 0.0
        %1130 = vmatprep.subr.mxu0 0.0
        %1131 = vmatpush1.msra.mxu0 0.0
        %1132 = vmatprep.subr.mxu0 0.0
        %1133 = vmatpush1.msra.mxu0 0.0
        %1134 = vmatprep.mubr.f32.mxu0 0.0
        %1135 = vmatmul.mubr.f32.gmra.mrb[0].mxu0 %v1068
        %v1136 = vpop.f32.mrb[0].mxu0
        %v1137 = vadd.f32 0.0, %v1136
        %v1138 = vpop.f32.mrb[0].mxu0
        %1139 = vdwg.mxu0
        %1141 = vrot.lane.b32.xlu0 %v1137, 16
        %v1142 = vpop.permute.xlu0 %1141
        %vm1144 = vcmask 261248
        %1145 = vst.msk [vmem:[%s533] sm:$0xff] %vm1144, %v1142
        %s1146 = sand.u32 %s275, 1
        %s1147 = scalar_lea.sflag [#allocation4], %s1146
        %s1148 = sand.u32 %s275, 1
        %s1149 = smul.addr %s1148, 8
        %s1150 = scalar_lea.vmem [#allocation13], %s1149
        %s1151 = sand.u32 %s301, 1
        %s1152 = scalar_lea.sflag [#allocation15], %s1151
        %s1153 = sand.u32 %s301, 1
        %s1154 = smul.addr %s1153, 16
        %s1155 = scalar_lea.vmem [#allocation14], %s1154
        // Predicated region
        $region85: #{tpu_custom_call.1} parent=59 // pred_check
          %p1156 = pneg %p285
        $region86: #{tpu_custom_call.1} parent=59 // pred_check_branch
          %1158 = sbr.rel (%p1156) target = $region88
        $region87: #{tpu_custom_call.1} parent=59 // pred_region
          %s1160 = ssub.s32 128, 128
          %1161 = vsyncadd %s1147, %s1160
          %s1162 = smul.addr %s37, 128
          %s1163 = scalar_lea.hbm %s10, %s1162
          %s1165 = sshll.u32 %s1150, 4
          %s1166 = int_to_ptr.vmem [resolvable:$true] %s1165
          %1168 = dma.vmem_to_hbm [thread:$0]  %s1166, 128, %s1163, %s1147
        $region88: #{tpu_custom_call.1} parent=59 // pred_fallthru
          _
        // Predicated region
        $region89: #{tpu_custom_call.1} parent=59 // pred_check
          %p1169 = pneg %p311
        $region90: #{tpu_custom_call.1} parent=59 // pred_check_branch
          %1171 = sbr.rel (%p1169) target = $region92
        $region91: #{tpu_custom_call.1} parent=59 // pred_region
          %s1173 = ssub.s32 256, 256
          %1174 = vsyncadd %s1152, %s1173
          %s1175 = smul.addr %s37, 128
          %s1176 = scalar_lea.hbm %s11, %s1175
          %s1177 = sshll.u32 %s1155, 4
          %s1178 = int_to_ptr.vmem [resolvable:$true] %s1177
          %1183 = dma.vmem_to_hbm [thread:$0]  %s1178, 256, %s1176, %s1152, 128, 256, 8
        $region92: #{tpu_custom_call.1} parent=59 // pred_fallthru
          _
      $region60: #{tpu_custom_call.1} parent=5 // pred_fallthru
        _
      %p1184 = scmp.le.s32.totalorder 2, %s32
      // Predicated region
      $region93: #{tpu_custom_call.1} parent=5 // pred_check
        %p1185 = pneg %p1184
      $region94: #{tpu_custom_call.1} parent=5 // pred_check_branch
        %1187 = sbr.rel (%p1185) target = $region96
      $region95: #{tpu_custom_call.1} parent=5 // pred_region
        %s1188 = ssub.s32 %s32, 2
        // Predicated region
        $region97: #{tpu_custom_call.1} parent=95 // pred_check
          %p1189 = pneg %p291
        $region98: #{tpu_custom_call.1} parent=95 // pred_check_branch
          %1191 = sbr.rel (%p1189) target = $region100
        $region99: #{tpu_custom_call.1} parent=95 // pred_region
          %s1192 = sand.u32 %s276, 1
          %s1193 = scalar_lea.sflag [#allocation4], %s1192
          %s1194 = sand.u32 %s276, 1
          %s1195 = smul.addr %s1194, 8
          %s1196 = scalar_lea.vmem [#allocation13], %s1195
          %1197 = dma.done %s1193, 128
        $region100: #{tpu_custom_call.1} parent=95 // pred_fallthru
          _
        // Predicated region
        $region101: #{tpu_custom_call.1} parent=95 // pred_check
          %p1198 = pneg %p317
        $region102: #{tpu_custom_call.1} parent=95 // pred_check_branch
          %1200 = sbr.rel (%p1198) target = $region104
        $region103: #{tpu_custom_call.1} parent=95 // pred_region
          %s1201 = sand.u32 %s302, 1
          %s1202 = scalar_lea.sflag [#allocation15], %s1201
          %s1203 = sand.u32 %s302, 1
          %s1204 = smul.addr %s1203, 16
          %s1205 = scalar_lea.vmem [#allocation14], %s1204
          %1206 = dma.done %s1202, 256
        $region104: #{tpu_custom_call.1} parent=95 // pred_fallthru
          _
      $region96: #{tpu_custom_call.1} parent=5 // pred_fallthru
        _
    $region6: #{tpu_custom_call.1} parent=1 // loop_footer
      %s36 = sadd.s32 1, %s32
    $region7: #{tpu_custom_call.1} parent=1 // loop_footer_branch
      %31 = sbr.rel target = $region3
    $region8: #{tpu_custom_call.1} parent=1 // loop_exit
      _
    %1207 = vsyncpa [#allocation3], 1
    %s1208 = scalar_lea.sflag [#allocation3], 1
    %1209 = vsyncpa %s1208, 1
    %1210 = vsyncpa [#allocation6], 1
    %s1211 = scalar_lea.sflag [#allocation6], 1
    %1212 = vsyncpa %s1211, 1
    %1213 = vsyncpa [#allocation9], 1
    %1214 = vsyncpa [#allocation12], 1
    %1215 = vsyncpa [#allocation4], 1
    %s1216 = scalar_lea.sflag [#allocation4], 1
    %1217 = vsyncpa %s1216, 1
    %1218 = vsyncpa [#allocation15], 1
    %s1219 = scalar_lea.sflag [#allocation15], 1
    %1220 = vsyncpa %s1219, 1

</llo_original>
